<compile_context>
chip_gen: v6e
topology: v6e:2x2x1
jax: 0.10.0
libtpu: 0.0.40
codegen_flags: <defaults>
</compile_context>

<pallas_src>
from functools import partial

import numpy as np

import jax
import jax.numpy as jnp
from jax import lax
from jax.experimental import pallas as pl
from jax.experimental.pallas import tpu as pltpu


def _round_up(x, m):
    return ((x + m - 1) // m) * m


def _cdiv(a, b):
    return -(-a // b)


def _device_kind():
    try:
        return jax.devices()[0].device_kind.lower()
    except Exception:
        return ""


def _choose_l_tile(L, per_lane_bytes, kind, batch):
    """Byte-targeted, lane-aligned (multiple of 128) length tile.

    Each grid step should move a few MiB so the ~0.35us fixed per-step overhead is
    amortised (v7x's faster HBM needs a larger target). Capped at 16384 lanes to bound
    the static chunk unroll and keep double-buffered tiles far below scoped VMEM.
    """
    target_bytes = (4 << 20) if ("7" in kind) else (3 << 20)
    t = target_bytes // max(per_lane_bytes, 1)
    t = max(128, min(t, 16384))
    t = (t // 128) * 128
    L128 = _round_up(L, 128)
    t = min(t, L128)
    # keep >= 2 total grid steps when possible so megacore has something to split
    if batch * _cdiv(L, t) < 2 and L128 >= 256:
        t = max(128, _round_up(_cdiv(L128, 2), 128))
    return t


def _make_kernel(n_chunks, gt, mm_dtype, add_dtype, conv_precision, up_precision):
    def kernel(x_ref, w_ref, g_ref, y_ref, o_ref):
        # x_ref: (1, Cin, Lt)   w_ref: (Cout, Cin)   g_ref: (gt, 2*gt)
        # y_ref / o_ref: (1, Cout, 2*Lt)  -- length on lanes (lane-dense) everywhere.
        w = w_ref[...]
        g = g_ref[...]
        for c in range(n_chunks):                       # small static unroll (<= 64)
            lo = c * gt
            xc = x_ref[0, :, lo:lo + gt]                                     # (Cin, gt)
            # conv(k=1) on this chunk, f32 accumulation on the MXU
            zc = jnp.dot(w, xc, preferred_element_type=jnp.float32,
                         precision=conv_precision)                           # (Cout, gt)
            # nearest upsample x2: z_chunk @ G interleaves each value twice (G is 0/1,
            # one nonzero per column -> exact copy in either dtype)
            up = jnp.dot(zc.astype(mm_dtype), g,
                         preferred_element_type=add_dtype,
                         precision=up_precision)                             # (Cout, 2*gt)
            yc = y_ref[0, :, 2 * lo:2 * (lo + gt)].astype(add_dtype)
            o_ref[0, :, 2 * lo:2 * (lo + gt)] = (up + yc).astype(o_ref.dtype)
    return kernel


@partial(jax.jit,
         static_argnames=("l_tile", "gt", "bf16_mm", "bf16_add", "vmem_limit"))
def _skip_upsample_impl(x, y, weight, *, l_tile, gt, bf16_mm, bf16_add, vmem_limit):
    B, Cin, L = x.shape
    Cout = weight.shape[0]
    out_dtype = jnp.result_type(x.dtype, y.dtype)

    mm_dtype = jnp.bfloat16 if bf16_mm else jnp.float32
    add_dtype = jnp.bfloat16 if bf16_add else jnp.float32
    conv_precision = lax.Precision.HIGHEST if x.dtype == jnp.float32 else None
    up_precision = None if bf16_mm else lax.Precision.HIGHEST

    # free squeeze; keep the 1x1-conv weight in x's dtype (accumulation is f32 in-kernel)
    w2 = weight[:, :, 0].astype(x.dtype)                                     # (Cout, Cin)

    # pad L up to a whole number of lane-aligned tiles; the padded tail computes zeros
    # (W @ 0 + 0) and is sliced off below. Keeps every block full-lane / unmasked.
    L_pad = _round_up(L, l_tile)
    if L_pad != L:
        x = jnp.pad(x, ((0, 0), (0, 0), (0, L_pad - L)))
        y = jnp.pad(y, ((0, 0), (0, 0), (0, 2 * (L_pad - L))))
    n_l = L_pad // l_tile
    n_chunks = l_tile // gt

    # constant interleave operator: G[i, 2i] = G[i, 2i+1] = 1  (nearest upsample x2)
    g = jnp.asarray(np.repeat(np.eye(gt, dtype=np.float32), 2, axis=1), dtype=mm_dtype)

    sx = jnp.dtype(x.dtype).itemsize
    sy = jnp.dtype(y.dtype).itemsize
    so = jnp.dtype(out_dtype).itemsize
    flops = 2 * B * Cout * L_pad * (Cin + 2 * gt)        # conv matmul + interleave matmul
    bytes_accessed = (B * Cin * L_pad * sx
                      + Cout * Cin * sx
                      + gt * 2 * gt * jnp.dtype(mm_dtype).itemsize
                      + B * Cout * 2 * L_pad * (sy + so))

    compiler_kwargs = dict(dimension_semantics=("parallel", "parallel"))
    if vmem_limit is not None:
        compiler_kwargs["vmem_limit_bytes"] = vmem_limit

    out = pl.pallas_call(
        _make_kernel(n_chunks, gt, mm_dtype, add_dtype, conv_precision, up_precision),
        out_shape=jax.ShapeDtypeStruct((B, Cout, 2 * L_pad), out_dtype),
        grid=(B, n_l),
        in_specs=[
            pl.BlockSpec((1, Cin, l_tile), lambda b, l: (b, 0, l)),          # x tile
            pl.BlockSpec((Cout, Cin), lambda b, l: (0, 0)),                  # weight (resident)
            pl.BlockSpec((gt, 2 * gt), lambda b, l: (0, 0)),                 # interleave op G
            pl.BlockSpec((1, Cout, 2 * l_tile), lambda b, l: (b, 0, l)),     # skip y tile
        ],
        out_specs=pl.BlockSpec((1, Cout, 2 * l_tile), lambda b, l: (b, 0, l)),
        compiler_params=pltpu.CompilerParams(**compiler_kwargs),
        cost_estimate=pl.CostEstimate(flops=flops, transcendentals=0,
                                      bytes_accessed=bytes_accessed),
    )(x, w2, g, y)

    if L_pad != L:
        out = out[:, :, :2 * L]
    return out


def skip_upsample(x_ncl, y_ncl, weight):
    """x_ncl: (B, Cin, L), y_ncl: (B, Cout, 2L), weight: (Cout, Cin, 1) -> (B, Cout, 2L)."""
    B, Cin, L = x_ncl.shape
    Cout = weight.shape[0]
    assert y_ncl.shape == (B, Cout, 2 * L), y_ncl.shape
    assert weight.shape == (Cout, Cin, 1), weight.shape

    out_dtype = jnp.result_type(x_ncl.dtype, y_ncl.dtype)
    kind = _device_kind()

    bf16_mm = (out_dtype == jnp.bfloat16)
    # bf16 skip-add only on chips with a bf16 VPU (v6e / v7x); f32 elsewhere (v5e etc.)
    bf16_add = bf16_mm and (("v6" in kind) or ("7" in kind))

    sx = jnp.dtype(x_ncl.dtype).itemsize
    sy = jnp.dtype(y_ncl.dtype).itemsize
    so = jnp.dtype(out_dtype).itemsize
    per_lane_bytes = Cin * sx + 2 * Cout * (sy + so)     # HBM (= VMEM block) bytes per lane
    l_tile = _choose_l_tile(L, per_lane_bytes, kind, B)
    gt = 256 if l_tile % 256 == 0 else 128               # interleave chunk; G <= 512 KiB

    # raise the scoped-VMEM cap only if double-buffered tiles approach the defaults
    est_vmem = 2 * l_tile * per_lane_bytes + 2 * (gt * 2 * gt * 4 + Cout * Cin * 4)
    vmem_limit = None
    if est_vmem > (12 << 20):
        vmem_limit = (48 << 20) if "7" in kind else (64 << 20)

    return _skip_upsample_impl(x_ncl, y_ncl, weight,
                               l_tile=l_tile, gt=gt, bf16_mm=bf16_mm,
                               bf16_add=bf16_add, vmem_limit=vmem_limit)


def reference(x_ncl, y_ncl, weight):
    # pure-JAX reference matching the PyTorch module (exact f32 matmul)
    x_up = jnp.repeat(x_ncl, 2, axis=-1)                      # nn.Upsample(scale_factor=2)
    conv = jnp.einsum("oc,bcl->bol", weight[:, :, 0], x_up,
                      precision=lax.Precision.HIGHEST)        # Conv1d(k=1, bias=False)
    return conv + y_ncl


if __name__ == "__main__":
    in_channels, s_factor = 8, 4          # Conv1d(in_channels + s_factor -> in_channels, k=1)
    Cin, Cout = in_channels + s_factor, in_channels

    key = jax.random.PRNGKey(0)
    kx, ky, kw = jax.random.split(key, 3)

    # case 1: small shapes, L not a multiple of 128 (exercises the padded-tail path)
    B, L = 2, 16
    x = jax.random.normal(kx, (B, Cin, L), dtype=jnp.float32)
    y = jax.random.normal(ky, (B, Cout, 2 * L), dtype=jnp.float32)
    weight = jax.random.normal(kw, (Cout, Cin, 1), dtype=jnp.float32) / jnp.sqrt(Cin)

    out = jax.block_until_ready(skip_upsample(x, y, weight))
    ref = reference(x, y, weight)
    assert out.shape == (B, Cout, 2 * L), out.shape
    assert jnp.allclose(out, ref, atol=1e-5, rtol=1e-5), float(jnp.max(jnp.abs(out - ref)))

    # case 2: longer length -> multi-chunk tile, f32 path with pinned HIGHEST precision
    B2, L2 = 2, 300
    kx2, ky2 = jax.random.split(kx, 2)
    x2 = jax.random.normal(kx2, (B2, Cin, L2), dtype=jnp.float32)
    y2 = jax.random.normal(ky2, (B2, Cout, 2 * L2), dtype=jnp.float32)
    out2 = jax.block_until_ready(skip_upsample(x2, y2, weight))
    ref2 = reference(x2, y2, weight)
    assert out2.shape == (B2, Cout, 2 * L2), out2.shape
    assert jnp.allclose(out2, ref2, atol=1e-5, rtol=1e-5), float(jnp.max(jnp.abs(out2 - ref2)))

    # case 3: bf16 end-to-end (single-pass MXU interleave; bf16 skip-add on v6e/v7x)
    xb, yb, wb = (a.astype(jnp.bfloat16) for a in (x2, y2, weight))
    outb = jax.block_until_ready(skip_upsample(xb, yb, wb))
    refb = reference(xb.astype(jnp.float32), yb.astype(jnp.float32), wb.astype(jnp.float32))
    assert outb.dtype == jnp.bfloat16, outb.dtype
    assert jnp.allclose(outb.astype(jnp.float32), refb, atol=7e-2, rtol=7e-2), \
        float(jnp.max(jnp.abs(outb.astype(jnp.float32) - refb)))

    print("KERNEL_OK")
</pallas_src>

<mosaic_0001>
module attributes {stable_mosaic.version = 11 : i64} {
  func.func @kernel(%arg0: i32, %arg1: i32, %arg2: memref<1x12x128xf32, #tpu.memory_space<vmem>>, %arg3: memref<8x12xf32, #tpu.memory_space<vmem>>, %arg4: memref<128x256xf32, #tpu.memory_space<vmem>>, %arg5: memref<1x8x256xf32, #tpu.memory_space<vmem>>, %arg6: memref<1x8x256xf32, #tpu.memory_space<vmem>>) attributes {dimension_semantics = [#tpu.dimension_semantics<parallel>, #tpu.dimension_semantics<parallel>], iteration_bounds = array<i64: 2, 1>, scalar_prefetch = 0 : i64, scratch_operands = 0 : i64, tpu.core_type = #tpu.core_type<tc>, window_params = [{transform_indices = @transform_0, window_bounds = array<i64: 1, 12, 128>}, {pipeline_mode = #tpu.pipeline_mode<synchronous>, transform_indices = @transform_1, window_bounds = array<i64: 8, 12>}, {pipeline_mode = #tpu.pipeline_mode<synchronous>, transform_indices = @transform_2, window_bounds = array<i64: 128, 256>}, {transform_indices = @transform_3, window_bounds = array<i64: 1, 8, 256>}, {transform_indices = @transform_4, window_bounds = array<i64: 1, 8, 256>}]} {
    %c0 = arith.constant 0 : index
    %c0_0 = arith.constant 0 : index
    %0 = vector.load %arg3[%c0, %c0_0] : memref<8x12xf32, #tpu.memory_space<vmem>>, vector<8x12xf32>
    %c0_1 = arith.constant 0 : index
    %c0_2 = arith.constant 0 : index
    %1 = vector.load %arg4[%c0_1, %c0_2] : memref<128x256xf32, #tpu.memory_space<vmem>>, vector<128x256xf32>
    %c0_3 = arith.constant 0 : index
    %c0_4 = arith.constant 0 : index
    %c0_5 = arith.constant 0 : index
    %2 = vector.load %arg2[%c0_3, %c0_4, %c0_5] : memref<1x12x128xf32, #tpu.memory_space<vmem>>, vector<1x12x128xf32>
    %3 = vector.shape_cast %2 : vector<1x12x128xf32> to vector<12x128xf32>
    %cst = arith.constant dense<0.000000e+00> : vector<8x128xf32>
    %4 = tpu.matmul %0, %3, %cst {dimension_numbers = #tpu.dot_dimension_numbers<[1], [0], [0], [1], [0, 0, 1, 1], [], []>, precision = #tpu.contract_precision<fp32>} : vector<8x12xf32>, vector<12x128xf32>, vector<8x128xf32> -> vector<8x128xf32>
    %cst_6 = arith.constant dense<0.000000e+00> : vector<8x256xf32>
    %5 = tpu.matmul %4, %1, %cst_6 {dimension_numbers = #tpu.dot_dimension_numbers<[1], [0], [0], [1], [0, 0, 1, 1], [], []>, precision = #tpu.contract_precision<fp32>} : vector<8x128xf32>, vector<128x256xf32>, vector<8x256xf32> -> vector<8x256xf32>
    %c0_7 = arith.constant 0 : index
    %c0_8 = arith.constant 0 : index
    %c0_9 = arith.constant 0 : index
    %6 = vector.load %arg5[%c0_7, %c0_8, %c0_9] : memref<1x8x256xf32, #tpu.memory_space<vmem>>, vector<1x8x256xf32>
    %7 = vector.shape_cast %6 : vector<1x8x256xf32> to vector<8x256xf32>
    %8 = arith.addf %5, %7 : vector<8x256xf32>
    %c0_10 = arith.constant 0 : index
    %c0_11 = arith.constant 0 : index
    %c0_12 = arith.constant 0 : index
    %9 = vector.load %arg6[%c0_10, %c0_11, %c0_12] : memref<1x8x256xf32, #tpu.memory_space<vmem>>, vector<1x8x256xf32>
    %10 = vector.shape_cast %9 : vector<1x8x256xf32> to vector<8x256xf32>
    %11 = vector.shape_cast %8 : vector<8x256xf32> to vector<1x8x256xf32>
    tpu.vector_store %arg6[%c0_10, %c0_11, %c0_12], %11 {strides = array<i32>} : memref<1x8x256xf32, #tpu.memory_space<vmem>>, vector<1x8x256xf32>,
    return
  }
  func.func @transform_0(%arg0: i32, %arg1: i32) -> (i32, i32, i32) {
    %c0_i32 = arith.constant 0 : i32
    %c0_i32_0 = arith.constant 0 : i32
    return %arg0, %c0_i32, %arg1 : i32, i32, i32
  }
  func.func @transform_1(%arg0: i32, %arg1: i32) -> (i32, i32) {
    %c0_i32 = arith.constant 0 : i32
    %c0_i32_0 = arith.constant 0 : i32
    %c0_i32_1 = arith.constant 0 : i32
    return %c0_i32, %c0_i32_0 : i32, i32
  }
  func.func @transform_2(%arg0: i32, %arg1: i32) -> (i32, i32) {
    %c0_i32 = arith.constant 0 : i32
    %c0_i32_0 = arith.constant 0 : i32
    %c0_i32_1 = arith.constant 0 : i32
    return %c0_i32, %c0_i32_0 : i32, i32
  }
  func.func @transform_3(%arg0: i32, %arg1: i32) -> (i32, i32, i32) {
    %c0_i32 = arith.constant 0 : i32
    %c0_i32_0 = arith.constant 0 : i32
    return %arg0, %c0_i32, %arg1 : i32, i32, i32
  }
  func.func @transform_4(%arg0: i32, %arg1: i32) -> (i32, i32, i32) {
    %c0_i32 = arith.constant 0 : i32
    %c0_i32_0 = arith.constant 0 : i32
    return %arg0, %c0_i32, %arg1 : i32, i32, i32
  }
}

</mosaic_0001>

<llo_original>
// kernel: _skip_upsample_impl.1
$region0: #{_skip_upsample_impl.1}
  #allocation0 [shape = 'u32[]', space=smem, size = 0x4, offset = 0x4, fixed_abs, tag = 'smem constant byte address 0x4 - core index']
  #allocation1 [shape = 'u32[144,128]{1,0:T(1,128)}', space=vmem, size = 0x12000, scoped, tag = 'internal scratch']
  %s0 = inlined_call_operand.vmem [shape: f32[2,12,128], index: 0, kind: input, shape index: {}]
  %s1 = inlined_call_operand.vmem [shape: f32[8,12], index: 1, kind: input, shape index: {}]
  %s2 = inlined_call_operand.hbm [shape: f32[128,256], index: 2, kind: input, shape index: {}]
  %s3 = inlined_call_operand.vmem [shape: f32[2,8,256], index: 3, kind: input, shape index: {}]
  %s4 = inlined_call_operand.vmem [shape: f32[2,8,256], index: 4, kind: output, shape index: {}]
  %s5 = sld [smem:[#allocation0]]
  $region53: #{_skip_upsample_impl.1} parent=0
    _
  %s7 = ssub.s32 1, %s5
  %s8 = scalar_select 0, %s7, %s5
  $region1: #{_skip_upsample_impl.1} parent=0
    #allocation2 [shape = 'u8[131072]{0}', space=vmem, size = 0x20000, scoped, tag = 'input window, operand 2, single buffered']
    #allocation3 [shape = 's32[2]{0}', space=sflag, size = 0x8, scoped, tag = 'scoped memory for _skip_upsample_impl.1']
    %9 = vsyncpa [#allocation3], 0
    loop: start=0, step=1, limit=4
    $region2: #{_skip_upsample_impl.1} parent=1 // loop_pre_header
      _
    $region3: #{_skip_upsample_impl.1} parent=1 // loop_header
      %s11 = sphi 0, %s15
      %p12 = scmp.ge.s32.totalorder %s11, 4
      %s18 = sphi 0, %s30
      %s19 = sphi 0, %s26
      %s20 = sphi 0, %s18
      %s21 = sphi 0, %s19
      %s22 = sphi 0, %s20
      %s23 = sphi 0, %s21
      %s35 = sphi 0, %s37
      %s38 = sphi 0, %s35
      %s39 = sphi 0, %s38
      %s55 = sphi 0, %s39
      %s59 = sphi 0, %s59
      %s61 = sphi 0, %s59
      %s62 = sphi 0, %s61
      %s76 = sphi 0, %s62
      %s80 = sphi 0, %s80
      %s82 = sphi 0, %s80
      %s83 = sphi 0, %s82
      %s97 = sphi 0, %s83
      %s105 = sphi 0, %s107
      %s108 = sphi 0, %s105
      %s109 = sphi 0, %s108
      %s125 = sphi 0, %s109
      %s133 = sphi 0, %s135
      %s136 = sphi 0, %s133
      %s137 = sphi 0, %s136
      %s153 = sphi 0, %s137
    $region4: #{_skip_upsample_impl.1} parent=1 // loop_header_branch
      %14 = sbr.rel (%p12) target = $region8
    $region5: #{_skip_upsample_impl.1} parent=1 // loop_body
      %s16 = ssub.s32 %s11, 1
      %s17 = ssub.s32 %s11, 2
      %s24 = sadd.s32 1, %s19
      %p25 = scmp.ge.s32.totalorder %s24, 1
      %s26 = scalar_select %p25, 0, %s24
      %s27 = sadd.s32 1, %s18
      %s28 = scalar_select %p25, %s27, %s18
      %p29 = scmp.ge.s32.totalorder %s28, 2
      %s30 = scalar_select %p29, 0, %s28
      %s31 = ssub.s32 %s18, %s30
      %s32 = ssub.s32 %s19, %s26
      %s33 = sor.u32 %s31, %s32
      %p34 = scmp.eq.s32.totalorder %s33, 0
      %s36 = sadd.s32 %s35, 1
      %s37 = scalar_select %p34, %s35, %s36
      %p40 = pneg %p34
      %p41 = scmp.eq.s32.totalorder %s11, 1
      %p42 = por %p40, %p41
      %p43 = scmp.ne.s32.totalorder %s35, %s38
      %p44 = scmp.eq.s32.totalorder %s11, 0
      %p45 = por %p43, %p44
      %p46 = scmp.ne.s32.totalorder %s35, %s38
      %p47 = scmp.eq.s32.totalorder %s16, 1
      %p48 = por %p46, %p47
      %p49 = scmp.ne.s32.totalorder %s38, %s39
      %p50 = scmp.eq.s32.totalorder %s16, 0
      %p51 = por %p49, %p50
      %p52 = scmp.ne.s32.totalorder %s38, %s39
      %p53 = scmp.eq.s32.totalorder %s17, 1
      %p54 = por %p52, %p53
      %p56 = scmp.ne.s32.totalorder %s39, %s55
      %p57 = scmp.eq.s32.totalorder %s17, 0
      %p58 = por %p56, %p57
      %s60 = sadd.s32 %s59, 1
      %p63 = scmp.eq.s32.totalorder %s11, 1
      %p64 = scmp.ne.s32.totalorder %s59, %s61
      %p65 = scmp.eq.s32.totalorder %s11, 0
      %p66 = por %p64, %p65
      %p67 = scmp.ne.s32.totalorder %s59, %s61
      %p68 = scmp.eq.s32.totalorder %s16, 1
      %p69 = por %p67, %p68
      %p70 = scmp.ne.s32.totalorder %s61, %s62
      %p71 = scmp.eq.s32.totalorder %s16, 0
      %p72 = por %p70, %p71
      %p73 = scmp.ne.s32.totalorder %s61, %s62
      %p74 = scmp.eq.s32.totalorder %s17, 1
      %p75 = por %p73, %p74
      %p77 = scmp.ne.s32.totalorder %s62, %s76
      %p78 = scmp.eq.s32.totalorder %s17, 0
      %p79 = por %p77, %p78
      %s81 = sadd.s32 %s80, 1
      %p84 = scmp.eq.s32.totalorder %s11, 1
      %p85 = scmp.ne.s32.totalorder %s80, %s82
      %p86 = scmp.eq.s32.totalorder %s11, 0
      %p87 = por %p85, %p86
      %p88 = scmp.ne.s32.totalorder %s80, %s82
      %p89 = scmp.eq.s32.totalorder %s16, 1
      %p90 = por %p88, %p89
      %p91 = scmp.ne.s32.totalorder %s82, %s83
      %p92 = scmp.eq.s32.totalorder %s16, 0
      %p93 = por %p91, %p92
      %p94 = scmp.ne.s32.totalorder %s82, %s83
      %p95 = scmp.eq.s32.totalorder %s17, 1
      %p96 = por %p94, %p95
      %p98 = scmp.ne.s32.totalorder %s83, %s97
      %p99 = scmp.eq.s32.totalorder %s17, 0
      %p100 = por %p98, %p99
      %s101 = ssub.s32 %s18, %s30
      %s102 = ssub.s32 %s19, %s26
      %s103 = sor.u32 %s101, %s102
      %p104 = scmp.eq.s32.totalorder %s103, 0
      %s106 = sadd.s32 %s105, 1
      %s107 = scalar_select %p104, %s105, %s106
      %p110 = pneg %p104
      %p111 = scmp.eq.s32.totalorder %s11, 1
      %p112 = por %p110, %p111
      %p113 = scmp.ne.s32.totalorder %s105, %s108
      %p114 = scmp.eq.s32.totalorder %s11, 0
      %p115 = por %p113, %p114
      %p116 = scmp.ne.s32.totalorder %s105, %s108
      %p117 = scmp.eq.s32.totalorder %s16, 1
      %p118 = por %p116, %p117
      %p119 = scmp.ne.s32.totalorder %s108, %s109
      %p120 = scmp.eq.s32.totalorder %s16, 0
      %p121 = por %p119, %p120
      %p122 = scmp.ne.s32.totalorder %s108, %s109
      %p123 = scmp.eq.s32.totalorder %s17, 1
      %p124 = por %p122, %p123
      %p126 = scmp.ne.s32.totalorder %s109, %s125
      %p127 = scmp.eq.s32.totalorder %s17, 0
      %p128 = por %p126, %p127
      %s129 = ssub.s32 %s18, %s30
      %s130 = ssub.s32 %s19, %s26
      %s131 = sor.u32 %s129, %s130
      %p132 = scmp.eq.s32.totalorder %s131, 0
      %s134 = sadd.s32 %s133, 1
      %s135 = scalar_select %p132, %s133, %s134
      %p138 = pneg %p132
      %p139 = scmp.eq.s32.totalorder %s11, 1
      %p140 = por %p138, %p139
      %p141 = scmp.ne.s32.totalorder %s133, %s136
      %p142 = scmp.eq.s32.totalorder %s11, 0
      %p143 = por %p141, %p142
      %p144 = scmp.ne.s32.totalorder %s133, %s136
      %p145 = scmp.eq.s32.totalorder %s16, 1
      %p146 = por %p144, %p145
      %p147 = scmp.ne.s32.totalorder %s136, %s137
      %p148 = scmp.eq.s32.totalorder %s16, 0
      %p149 = por %p147, %p148
      %p150 = scmp.ne.s32.totalorder %s136, %s137
      %p151 = scmp.eq.s32.totalorder %s17, 1
      %p152 = por %p150, %p151
      %p154 = scmp.ne.s32.totalorder %s137, %s153
      %p155 = scmp.eq.s32.totalorder %s17, 0
      %p156 = por %p154, %p155
      %p157 = scmp.le.s32.totalorder 1, %s11
      %p158 = scmp.lt.s32.totalorder %s11, 3
      %p159 = pnand %p157, %p158
      %p160 = pneg %p159
      // Predicated region
      $region9: #{_skip_upsample_impl.1} parent=5 // pred_check
        _
      $region10: #{_skip_upsample_impl.1} parent=5 // pred_check_branch
        %162 = sbr.rel (%p159) target = $region12
      $region11: #{_skip_upsample_impl.1} parent=5 // pred_region
        %s163 = ssub.s32 %s11, 1
        // Predicated region
        $region13: #{_skip_upsample_impl.1} parent=11 // pred_check
          %p164 = pneg %p72
        $region14: #{_skip_upsample_impl.1} parent=11 // pred_check_branch
          %166 = sbr.rel (%p164) target = $region16
        $region15: #{_skip_upsample_impl.1} parent=11 // pred_region
          _
        $region16: #{_skip_upsample_impl.1} parent=11 // pred_fallthru
          _
        // Predicated region
        $region17: #{_skip_upsample_impl.1} parent=11 // pred_check
          %p167 = pneg %p93
        $region18: #{_skip_upsample_impl.1} parent=11 // pred_check_branch
          %169 = sbr.rel (%p167) target = $region20
        $region19: #{_skip_upsample_impl.1} parent=11 // pred_region
          %s171 = ssub.s32 4096, 4096
          %172 = vsyncadd [#allocation3], %s171
          %s173 = sshll.u32 [#allocation2], 4
          %s174 = int_to_ptr.vmem [resolvable:$true] %s173
          %179 = dma.hbm_to_vmem [thread:$0]  %s2, 4096, %s174, [#allocation3], 256, 256, 16
        $region20: #{_skip_upsample_impl.1} parent=11 // pred_fallthru
          _
      $region12: #{_skip_upsample_impl.1} parent=5 // pred_fallthru
        _
      %p180 = scmp.lt.s32.totalorder %s11, 2
      // Predicated region
      $region21: #{_skip_upsample_impl.1} parent=5 // pred_check
        %p181 = pneg %p180
      $region22: #{_skip_upsample_impl.1} parent=5 // pred_check_branch
        %183 = sbr.rel (%p181) target = $region24
      $region23: #{_skip_upsample_impl.1} parent=5 // pred_region
        // Predicated region
        $region25: #{_skip_upsample_impl.1} parent=23 // pred_check
          %p184 = pneg %p45
        $region26: #{_skip_upsample_impl.1} parent=23 // pred_check_branch
          %186 = sbr.rel (%p184) target = $region28
        $region27: #{_skip_upsample_impl.1} parent=23 // pred_region
          %p187 = scmp.lt.s32.totalorder %s18, 1
          %s188 = scalar_select %p187, %s18, 1
          %p189 = scmp.lt.s32.totalorder %s19, 0
          %s190 = scalar_select %p189, %s19, 0
          %s191 = smul.addr %s188, 2
          %s192 = sadd.s32 %s190, %s191
          %s193 = smul.addr %s192, 8
          %s194 = scalar_lea.vmem %s0, %s193
        $region28: #{_skip_upsample_impl.1} parent=23 // pred_fallthru
          _
        // Predicated region
        $region29: #{_skip_upsample_impl.1} parent=23 // pred_check
          %p195 = pneg %p115
        $region30: #{_skip_upsample_impl.1} parent=23 // pred_check_branch
          %197 = sbr.rel (%p195) target = $region32
        $region31: #{_skip_upsample_impl.1} parent=23 // pred_region
          %s198 = smul.u32 2, %s19
          %p199 = scmp.lt.s32.totalorder %s18, 1
          %s200 = scalar_select %p199, %s18, 1
          %p201 = scmp.lt.s32.totalorder %s198, 1
          %s202 = scalar_select %p201, %s198, 1
          %s203 = smul.addr %s200, 2
          %s204 = sadd.s32 %s202, %s203
          %s205 = smul.addr %s204, 8
          %s206 = scalar_lea.vmem %s3, %s205
          %s207 = smul.u32 2, %s19
        $region32: #{_skip_upsample_impl.1} parent=23 // pred_fallthru
          _
      $region24: #{_skip_upsample_impl.1} parent=5 // pred_fallthru
        _
      %p208 = scmp.le.s32.totalorder 1, %s11
      %p209 = scmp.lt.s32.totalorder %s11, 3
      %p210 = pnand %p208, %p209
      %p211 = pneg %p210
      // Predicated region
      $region33: #{_skip_upsample_impl.1} parent=5 // pred_check
        _
      $region34: #{_skip_upsample_impl.1} parent=5 // pred_check_branch
        %213 = sbr.rel (%p210) target = $region36
      $region35: #{_skip_upsample_impl.1} parent=5 // pred_region
        %s214 = ssub.s32 %s11, 1
        // Predicated region
        $region37: #{_skip_upsample_impl.1} parent=35 // pred_check
          %p215 = pneg %p93
        $region38: #{_skip_upsample_impl.1} parent=35 // pred_check_branch
          %217 = sbr.rel (%p215) target = $region40
        $region39: #{_skip_upsample_impl.1} parent=35 // pred_region
          %218 = dma.done [#allocation3], 4096
        $region40: #{_skip_upsample_impl.1} parent=35 // pred_fallthru
          _
        %p219 = scmp.lt.s32.totalorder %s20, 1
        %s220 = scalar_select %p219, %s20, 1
        %p221 = scmp.lt.s32.totalorder %s21, 0
        %s222 = scalar_select %p221, %s21, 0
        %s223 = smul.addr %s220, 2
        %s224 = sadd.s32 %s222, %s223
        %s225 = smul.addr %s224, 8
        %s226 = scalar_lea.vmem %s0, %s225
        %p227 = pneg %p51
        %p228 = pneg %p48
        %p229 = pneg %p72
        %p230 = pneg %p69
        %p231 = pneg %p93
        %p232 = pneg %p90
        %s233 = smul.u32 2, %s21
        %p234 = scmp.lt.s32.totalorder %s20, 1
        %s235 = scalar_select %p234, %s20, 1
        %p236 = scmp.lt.s32.totalorder %s233, 1
        %s237 = scalar_select %p236, %s233, 1
        %s238 = smul.addr %s235, 2
        %s239 = sadd.s32 %s237, %s238
        %s240 = smul.addr %s239, 8
        %s241 = scalar_lea.vmem %s3, %s240
        %p242 = pneg %p121
        %p243 = pneg %p118
        %p244 = pneg %p149
        %p245 = pneg %p146
        %s246 = smul.u32 2, %s21
        %p247 = scmp.lt.s32.totalorder %s20, 1
        %s248 = scalar_select %p247, %s20, 1
        %p249 = scmp.lt.s32.totalorder %s246, 1
        %s250 = scalar_select %p249, %s246, 1
        %s251 = smul.addr %s248, 2
        %s252 = sadd.s32 %s250, %s251
        %s253 = smul.addr %s252, 8
        %s254 = scalar_lea.vmem %s4, %s253
        %p255 = scmp.lt.s32.totalorder %s20, 1
        %s256 = scalar_select %p255, %s20, 1
        %p257 = scmp.lt.s32.totalorder %s21, 0
        %s258 = scalar_select %p257, %s21, 0
        %s259 = smul.addr %s256, 2
        %s260 = sadd.s32 %s258, %s259
        %s261 = smul.addr %s260, 8
        %s262 = scalar_lea.vmem %s0, %s261
        %s263 = smul.u32 2, %s21
        %p264 = scmp.lt.s32.totalorder %s20, 1
        %s265 = scalar_select %p264, %s20, 1
        %p266 = scmp.lt.s32.totalorder %s263, 1
        %s267 = scalar_select %p266, %s263, 1
        %s268 = smul.addr %s265, 2
        %s269 = sadd.s32 %s267, %s268
        %s270 = smul.addr %s269, 8
        %s271 = scalar_lea.vmem %s3, %s270
        %s272 = smul.u32 2, %s21
        %s273 = smul.u32 2, %s21
        %p274 = scmp.lt.s32.totalorder %s20, 1
        %s275 = scalar_select %p274, %s20, 1
        %p276 = scmp.lt.s32.totalorder %s273, 1
        %s277 = scalar_select %p276, %s273, 1
        %s278 = smul.addr %s275, 2
        %s279 = sadd.s32 %s277, %s278
        %s280 = smul.addr %s279, 8
        %s281 = scalar_lea.vmem %s4, %s280
        %s282 = smul.u32 2, %s21
        %v283 = vld [vmem:[%s1] sm:$0xff]
        %v284 = vld [vmem:[#allocation2] sm:$0xff]
        %v285 = vld [vmem:[#allocation2 + $0x8] sm:$0xff]
        %v286 = vld [vmem:[#allocation2 + $0x10] sm:$0xff]
        %v287 = vld [vmem:[#allocation2 + $0x18] sm:$0xff]
        %v288 = vld [vmem:[#allocation2 + $0x20] sm:$0xff]
        %v289 = vld [vmem:[#allocation2 + $0x28] sm:$0xff]
        %v290 = vld [vmem:[#allocation2 + $0x30] sm:$0xff]
        %v291 = vld [vmem:[#allocation2 + $0x38] sm:$0xff]
        %v292 = vld [vmem:[#allocation2 + $0x40] sm:$0xff]
        %v293 = vld [vmem:[#allocation2 + $0x48] sm:$0xff]
        %v294 = vld [vmem:[#allocation2 + $0x50] sm:$0xff]
        %v295 = vld [vmem:[#allocation2 + $0x58] sm:$0xff]
        %v296 = vld [vmem:[#allocation2 + $0x60] sm:$0xff]
        %v297 = vld [vmem:[#allocation2 + $0x68] sm:$0xff]
        %v298 = vld [vmem:[#allocation2 + $0x70] sm:$0xff]
        %v299 = vld [vmem:[#allocation2 + $0x78] sm:$0xff]
        %v300 = vld [vmem:[#allocation2 + $0x80] sm:$0xff]
        %v301 = vld [vmem:[#allocation2 + $0x88] sm:$0xff]
        %v302 = vld [vmem:[#allocation2 + $0x90] sm:$0xff]
        %v303 = vld [vmem:[#allocation2 + $0x98] sm:$0xff]
        %v304 = vld [vmem:[#allocation2 + $0xa0] sm:$0xff]
        %v305 = vld [vmem:[#allocation2 + $0xa8] sm:$0xff]
        %v306 = vld [vmem:[#allocation2 + $0xb0] sm:$0xff]
        %v307 = vld [vmem:[#allocation2 + $0xb8] sm:$0xff]
        %v308 = vld [vmem:[#allocation2 + $0xc0] sm:$0xff]
        %v309 = vld [vmem:[#allocation2 + $0xc8] sm:$0xff]
        %v310 = vld [vmem:[#allocation2 + $0xd0] sm:$0xff]
        %v311 = vld [vmem:[#allocation2 + $0xd8] sm:$0xff]
        %v312 = vld [vmem:[#allocation2 + $0xe0] sm:$0xff]
        %v313 = vld [vmem:[#allocation2 + $0xe8] sm:$0xff]
        %v314 = vld [vmem:[#allocation2 + $0xf0] sm:$0xff]
        %v315 = vld [vmem:[#allocation2 + $0xf8] sm:$0xff]
        %v316 = vld [vmem:[%s262] sm:$0xff]
        %v317 = vld [vmem:[%s262 + $0x8] sm:$0xf]
        %vm318 = vcmask 97280
        %v320 = vsel %vm318, %v283, 0
        %vm322 = vcmask 1043456
        %v324 = vsel %vm322, %v317, 0
        %326 = vmatprep.subr.mxu0 0.0
        %327 = vmatpush1.msra.mxu0 0.0
        %328 = vmatprep.subr.mxu0 0.0
        %329 = vmatpush1.msra.mxu0 0.0
        %330 = vmatprep.subr.mxu0 0.0
        %331 = vmatpush1.msra.mxu0 0.0
        %332 = vmatprep.subr.mxu0 0.0
        %333 = vmatpush1.msra.mxu0 0.0
        %334 = vmatprep.subr.mxu0 0.0
        %335 = vmatpush1.msra.mxu0 0.0
        %336 = vmatprep.subr.mxu0 0.0
        %337 = vmatpush1.msra.mxu0 0.0
        %338 = vmatprep.subr.mxu0 0.0
        %339 = vmatpush1.msra.mxu0 0.0
        %340 = vmatprep.subr.mxu0 0.0
        %341 = vmatpush1.msra.mxu0 0.0
        %342 = vmatprep.subr.mxu0 0.0
        %343 = vmatpush1.msra.mxu0 0.0
        %344 = vmatprep.subr.mxu0 0.0
        %345 = vmatpush1.msra.mxu0 0.0
        %346 = vmatprep.subr.mxu0 0.0
        %347 = vmatpush1.msra.mxu0 0.0
        %348 = vmatprep.subr.mxu0 0.0
        %349 = vmatpush1.msra.mxu0 0.0
        %350 = vmatprep.subr.mxu0 0.0
        %351 = vmatpush1.msra.mxu0 0.0
        %352 = vmatprep.subr.mxu0 0.0
        %353 = vmatpush1.msra.mxu0 0.0
        %354 = vmatprep.subr.mxu0 0.0
        %v355 = vand.u32 %v324, 4294901760
        %356 = vmatpush1.msra.mxu0 %v355
        %357 = vmatprep.subr.mxu0 0.0
        %v358 = vand.u32 %v316, 4294901760
        %359 = vmatpush1.msra.mxu0 %v358
        %360 = vmatprep.subr.mxu0 0.0
        %361 = vmatpush2.msra.mxu0 0.0
        %362 = vmatprep.subr.mxu0 0.0
        %363 = vmatpush2.msra.mxu0 0.0
        %364 = vmatprep.subr.mxu0 0.0
        %365 = vmatpush2.msra.mxu0 0.0
        %366 = vmatprep.subr.mxu0 0.0
        %367 = vmatpush2.msra.mxu0 0.0
        %368 = vmatprep.subr.mxu0 0.0
        %369 = vmatpush2.msra.mxu0 0.0
        %370 = vmatprep.subr.mxu0 0.0
        %371 = vmatpush2.msra.mxu0 0.0
        %372 = vmatprep.subr.mxu0 0.0
        %373 = vmatpush2.msra.mxu0 0.0
        %374 = vmatprep.subr.mxu0 0.0
        %375 = vmatpush2.msra.mxu0 0.0
        %376 = vmatprep.subr.mxu0 0.0
        %377 = vmatpush2.msra.mxu0 0.0
        %378 = vmatprep.subr.mxu0 0.0
        %379 = vmatpush2.msra.mxu0 0.0
        %380 = vmatprep.subr.mxu0 0.0
        %381 = vmatpush2.msra.mxu0 0.0
        %382 = vmatprep.subr.mxu0 0.0
        %383 = vmatpush2.msra.mxu0 0.0
        %384 = vmatprep.subr.mxu0 0.0
        %385 = vmatpush2.msra.mxu0 0.0
        %386 = vmatprep.subr.mxu0 0.0
        %387 = vmatpush2.msra.mxu0 0.0
        %388 = vmatprep.subr.mxu0 0.0
        %389 = vmatpush2.msra.mxu0 0.0
        %390 = vmatprep.subr.mxu0 0.0
        %391 = vmatpush2.msra.mxu0 0.0
        %392 = vmatprep.mubr.f32.mxu0 0.0
        %v393 = vand.u32 %v320, 4294901760
        %v394 = vsub.f32 %v320, %v393
        %v395 = vand.u32 %v394, 4294901760
        %v396 = vsub.f32 %v394, %v395
        %v397 = vand.u32 %v396, 4294901760
        %398 = vmatmul.mubr.f32.gmra.mxu0 %v397
        %v399 = vpop.f32.mrf.mxu0
        %v400 = vadd.f32 0.0, %v399
        %v401 = vpop.f32.mrf.mxu0
        %402 = vdwg.mxu0
        %403 = vmatprep.subr.mxu0 0.0
        %404 = vmatpush1.msra.mxu0 0.0
        %405 = vmatprep.subr.mxu0 0.0
        %406 = vmatpush1.msra.mxu0 0.0
        %407 = vmatprep.subr.mxu0 0.0
        %408 = vmatpush1.msra.mxu0 0.0
        %409 = vmatprep.subr.mxu0 0.0
        %410 = vmatpush1.msra.mxu0 0.0
        %411 = vmatprep.subr.mxu0 0.0
        %412 = vmatpush1.msra.mxu0 0.0
        %413 = vmatprep.subr.mxu0 0.0
        %414 = vmatpush1.msra.mxu0 0.0
        %415 = vmatprep.subr.mxu0 0.0
        %416 = vmatpush1.msra.mxu0 0.0
        %417 = vmatprep.subr.mxu0 0.0
        %418 = vmatpush1.msra.mxu0 0.0
        %419 = vmatprep.subr.mxu0 0.0
        %420 = vmatpush1.msra.mxu0 0.0
        %421 = vmatprep.subr.mxu0 0.0
        %422 = vmatpush1.msra.mxu0 0.0
        %423 = vmatprep.subr.mxu0 0.0
        %424 = vmatpush1.msra.mxu0 0.0
        %425 = vmatprep.subr.mxu0 0.0
        %426 = vmatpush1.msra.mxu0 0.0
        %427 = vmatprep.subr.mxu0 0.0
        %428 = vmatpush1.msra.mxu0 0.0
        %429 = vmatprep.subr.mxu0 0.0
        %430 = vmatpush1.msra.mxu0 0.0
        %431 = vmatprep.subr.mxu0 0.0
        %v432 = vand.u32 %v324, 4294901760
        %v433 = vsub.f32 %v324, %v432
        %v434 = vand.u32 %v433, 4294901760
        %v435 = vsub.f32 %v433, %v434
        %v436 = vand.u32 %v435, 4294901760
        %437 = vmatpush1.msra.mxu0 %v436
        %438 = vmatprep.subr.mxu0 0.0
        %v439 = vand.u32 %v316, 4294901760
        %v440 = vsub.f32 %v316, %v439
        %v441 = vand.u32 %v440, 4294901760
        %v442 = vsub.f32 %v440, %v441
        %v443 = vand.u32 %v442, 4294901760
        %444 = vmatpush1.msra.mxu0 %v443
        %445 = vmatprep.subr.mxu0 0.0
        %446 = vmatpush2.msra.mxu0 0.0
        %447 = vmatprep.subr.mxu0 0.0
        %448 = vmatpush2.msra.mxu0 0.0
        %449 = vmatprep.subr.mxu0 0.0
        %450 = vmatpush2.msra.mxu0 0.0
        %451 = vmatprep.subr.mxu0 0.0
        %452 = vmatpush2.msra.mxu0 0.0
        %453 = vmatprep.subr.mxu0 0.0
        %454 = vmatpush2.msra.mxu0 0.0
        %455 = vmatprep.subr.mxu0 0.0
        %456 = vmatpush2.msra.mxu0 0.0
        %457 = vmatprep.subr.mxu0 0.0
        %458 = vmatpush2.msra.mxu0 0.0
        %459 = vmatprep.subr.mxu0 0.0
        %460 = vmatpush2.msra.mxu0 0.0
        %461 = vmatprep.subr.mxu0 0.0
        %462 = vmatpush2.msra.mxu0 0.0
        %463 = vmatprep.subr.mxu0 0.0
        %464 = vmatpush2.msra.mxu0 0.0
        %465 = vmatprep.subr.mxu0 0.0
        %466 = vmatpush2.msra.mxu0 0.0
        %467 = vmatprep.subr.mxu0 0.0
        %468 = vmatpush2.msra.mxu0 0.0
        %469 = vmatprep.subr.mxu0 0.0
        %470 = vmatpush2.msra.mxu0 0.0
        %471 = vmatprep.subr.mxu0 0.0
        %472 = vmatpush2.msra.mxu0 0.0
        %473 = vmatprep.subr.mxu0 0.0
        %474 = vmatpush2.msra.mxu0 0.0
        %475 = vmatprep.subr.mxu0 0.0
        %476 = vmatpush2.msra.mxu0 0.0
        %477 = vmatprep.mubr.f32.mxu0 0.0
        %v478 = vand.u32 %v320, 4294901760
        %479 = vmatmul.mubr.f32.gmra.mxu0 %v478
        %v480 = vpop.f32.mrf.mxu0
        %v481 = vadd.f32 %v400, %v480
        %v482 = vpop.f32.mrf.mxu0
        %483 = vdwg.mxu0
        %484 = vmatprep.subr.mxu0 0.0
        %485 = vmatpush1.msra.mxu0 0.0
        %486 = vmatprep.subr.mxu0 0.0
        %487 = vmatpush1.msra.mxu0 0.0
        %488 = vmatprep.subr.mxu0 0.0
        %489 = vmatpush1.msra.mxu0 0.0
        %490 = vmatprep.subr.mxu0 0.0
        %491 = vmatpush1.msra.mxu0 0.0
        %492 = vmatprep.subr.mxu0 0.0
        %493 = vmatpush1.msra.mxu0 0.0
        %494 = vmatprep.subr.mxu0 0.0
        %495 = vmatpush1.msra.mxu0 0.0
        %496 = vmatprep.subr.mxu0 0.0
        %497 = vmatpush1.msra.mxu0 0.0
        %498 = vmatprep.subr.mxu0 0.0
        %499 = vmatpush1.msra.mxu0 0.0
        %500 = vmatprep.subr.mxu0 0.0
        %501 = vmatpush1.msra.mxu0 0.0
        %502 = vmatprep.subr.mxu0 0.0
        %503 = vmatpush1.msra.mxu0 0.0
        %504 = vmatprep.subr.mxu0 0.0
        %505 = vmatpush1.msra.mxu0 0.0
        %506 = vmatprep.subr.mxu0 0.0
        %507 = vmatpush1.msra.mxu0 0.0
        %508 = vmatprep.subr.mxu0 0.0
        %509 = vmatpush1.msra.mxu0 0.0
        %510 = vmatprep.subr.mxu0 0.0
        %511 = vmatpush1.msra.mxu0 0.0
        %512 = vmatprep.subr.mxu0 0.0
        %v513 = vand.u32 %v324, 4294901760
        %v514 = vsub.f32 %v324, %v513
        %515 = vmatpush1.msra.mxu0 %v514
        %516 = vmatprep.subr.mxu0 0.0
        %v517 = vand.u32 %v316, 4294901760
        %v518 = vsub.f32 %v316, %v517
        %519 = vmatpush1.msra.mxu0 %v518
        %520 = vmatprep.subr.mxu0 0.0
        %521 = vmatpush2.msra.mxu0 0.0
        %522 = vmatprep.subr.mxu0 0.0
        %523 = vmatpush2.msra.mxu0 0.0
        %524 = vmatprep.subr.mxu0 0.0
        %525 = vmatpush2.msra.mxu0 0.0
        %526 = vmatprep.subr.mxu0 0.0
        %527 = vmatpush2.msra.mxu0 0.0
        %528 = vmatprep.subr.mxu0 0.0
        %529 = vmatpush2.msra.mxu0 0.0
        %530 = vmatprep.subr.mxu0 0.0
        %531 = vmatpush2.msra.mxu0 0.0
        %532 = vmatprep.subr.mxu0 0.0
        %533 = vmatpush2.msra.mxu0 0.0
        %534 = vmatprep.subr.mxu0 0.0
        %535 = vmatpush2.msra.mxu0 0.0
        %536 = vmatprep.subr.mxu0 0.0
        %537 = vmatpush2.msra.mxu0 0.0
        %538 = vmatprep.subr.mxu0 0.0
        %539 = vmatpush2.msra.mxu0 0.0
        %540 = vmatprep.subr.mxu0 0.0
        %541 = vmatpush2.msra.mxu0 0.0
        %542 = vmatprep.subr.mxu0 0.0
        %543 = vmatpush2.msra.mxu0 0.0
        %544 = vmatprep.subr.mxu0 0.0
        %545 = vmatpush2.msra.mxu0 0.0
        %546 = vmatprep.subr.mxu0 0.0
        %547 = vmatpush2.msra.mxu0 0.0
        %548 = vmatprep.subr.mxu0 0.0
        %549 = vmatpush2.msra.mxu0 0.0
        %550 = vmatprep.subr.mxu0 0.0
        %551 = vmatpush2.msra.mxu0 0.0
        %552 = vmatprep.mubr.f32.mxu0 0.0
        %v553 = vand.u32 %v320, 4294901760
        %v554 = vsub.f32 %v320, %v553
        %555 = vmatmul.mubr.f32.gmra.mxu0 %v554
        %v556 = vpop.f32.mrf.mxu0
        %v557 = vadd.f32 %v481, %v556
        %v558 = vpop.f32.mrf.mxu0
        %559 = vdwg.mxu0
        %560 = vmatprep.subr.mxu0 0.0
        %561 = vmatpush1.msra.mxu0 0.0
        %562 = vmatprep.subr.mxu0 0.0
        %563 = vmatpush1.msra.mxu0 0.0
        %564 = vmatprep.subr.mxu0 0.0
        %565 = vmatpush1.msra.mxu0 0.0
        %566 = vmatprep.subr.mxu0 0.0
        %567 = vmatpush1.msra.mxu0 0.0
        %568 = vmatprep.subr.mxu0 0.0
        %569 = vmatpush1.msra.mxu0 0.0
        %570 = vmatprep.subr.mxu0 0.0
        %571 = vmatpush1.msra.mxu0 0.0
        %572 = vmatprep.subr.mxu0 0.0
        %573 = vmatpush1.msra.mxu0 0.0
        %574 = vmatprep.subr.mxu0 0.0
        %575 = vmatpush1.msra.mxu0 0.0
        %576 = vmatprep.subr.mxu0 0.0
        %577 = vmatpush1.msra.mxu0 0.0
        %578 = vmatprep.subr.mxu0 0.0
        %579 = vmatpush1.msra.mxu0 0.0
        %580 = vmatprep.subr.mxu0 0.0
        %581 = vmatpush1.msra.mxu0 0.0
        %582 = vmatprep.subr.mxu0 0.0
        %583 = vmatpush1.msra.mxu0 0.0
        %584 = vmatprep.subr.mxu0 0.0
        %585 = vmatpush1.msra.mxu0 0.0
        %586 = vmatprep.subr.mxu0 0.0
        %587 = vmatpush1.msra.mxu0 0.0
        %588 = vmatprep.subr.mxu0 0.0
        %v589 = vand.u32 %v324, 4294901760
        %590 = vmatpush1.msra.mxu0 %v589
        %591 = vmatprep.subr.mxu0 0.0
        %v592 = vand.u32 %v316, 4294901760
        %593 = vmatpush1.msra.mxu0 %v592
        %594 = vmatprep.subr.mxu0 0.0
        %595 = vmatpush2.msra.mxu0 0.0
        %596 = vmatprep.subr.mxu0 0.0
        %597 = vmatpush2.msra.mxu0 0.0
        %598 = vmatprep.subr.mxu0 0.0
        %599 = vmatpush2.msra.mxu0 0.0
        %600 = vmatprep.subr.mxu0 0.0
        %601 = vmatpush2.msra.mxu0 0.0
        %602 = vmatprep.subr.mxu0 0.0
        %603 = vmatpush2.msra.mxu0 0.0
        %604 = vmatprep.subr.mxu0 0.0
        %605 = vmatpush2.msra.mxu0 0.0
        %606 = vmatprep.subr.mxu0 0.0
        %607 = vmatpush2.msra.mxu0 0.0
        %608 = vmatprep.subr.mxu0 0.0
        %609 = vmatpush2.msra.mxu0 0.0
        %610 = vmatprep.subr.mxu0 0.0
        %611 = vmatpush2.msra.mxu0 0.0
        %612 = vmatprep.subr.mxu0 0.0
        %613 = vmatpush2.msra.mxu0 0.0
        %614 = vmatprep.subr.mxu0 0.0
        %615 = vmatpush2.msra.mxu0 0.0
        %616 = vmatprep.subr.mxu0 0.0
        %617 = vmatpush2.msra.mxu0 0.0
        %618 = vmatprep.subr.mxu0 0.0
        %619 = vmatpush2.msra.mxu0 0.0
        %620 = vmatprep.subr.mxu0 0.0
        %621 = vmatpush2.msra.mxu0 0.0
        %622 = vmatprep.subr.mxu0 0.0
        %623 = vmatpush2.msra.mxu0 0.0
        %624 = vmatprep.subr.mxu0 0.0
        %625 = vmatpush2.msra.mxu0 0.0
        %626 = vmatprep.mubr.f32.mxu0 0.0
        %v627 = vand.u32 %v320, 4294901760
        %v628 = vsub.f32 %v320, %v627
        %v629 = vand.u32 %v628, 4294901760
        %630 = vmatmul.mubr.f32.gmra.mxu0 %v629
        %v631 = vpop.f32.mrf.mxu0
        %v632 = vadd.f32 %v557, %v631
        %v633 = vpop.f32.mrf.mxu0
        %634 = vdwg.mxu0
        %635 = vmatprep.subr.mxu0 0.0
        %636 = vmatpush1.msra.mxu0 0.0
        %637 = vmatprep.subr.mxu0 0.0
        %638 = vmatpush1.msra.mxu0 0.0
        %639 = vmatprep.subr.mxu0 0.0
        %640 = vmatpush1.msra.mxu0 0.0
        %641 = vmatprep.subr.mxu0 0.0
        %642 = vmatpush1.msra.mxu0 0.0
        %643 = vmatprep.subr.mxu0 0.0
        %644 = vmatpush1.msra.mxu0 0.0
        %645 = vmatprep.subr.mxu0 0.0
        %646 = vmatpush1.msra.mxu0 0.0
        %647 = vmatprep.subr.mxu0 0.0
        %648 = vmatpush1.msra.mxu0 0.0
        %649 = vmatprep.subr.mxu0 0.0
        %650 = vmatpush1.msra.mxu0 0.0
        %651 = vmatprep.subr.mxu0 0.0
        %652 = vmatpush1.msra.mxu0 0.0
        %653 = vmatprep.subr.mxu0 0.0
        %654 = vmatpush1.msra.mxu0 0.0
        %655 = vmatprep.subr.mxu0 0.0
        %656 = vmatpush1.msra.mxu0 0.0
        %657 = vmatprep.subr.mxu0 0.0
        %658 = vmatpush1.msra.mxu0 0.0
        %659 = vmatprep.subr.mxu0 0.0
        %660 = vmatpush1.msra.mxu0 0.0
        %661 = vmatprep.subr.mxu0 0.0
        %662 = vmatpush1.msra.mxu0 0.0
        %663 = vmatprep.subr.mxu0 0.0
        %v664 = vand.u32 %v324, 4294901760
        %v665 = vsub.f32 %v324, %v664
        %v666 = vand.u32 %v665, 4294901760
        %667 = vmatpush1.msra.mxu0 %v666
        %668 = vmatprep.subr.mxu0 0.0
        %v669 = vand.u32 %v316, 4294901760
        %v670 = vsub.f32 %v316, %v669
        %v671 = vand.u32 %v670, 4294901760
        %672 = vmatpush1.msra.mxu0 %v671
        %673 = vmatprep.subr.mxu0 0.0
        %674 = vmatpush2.msra.mxu0 0.0
        %675 = vmatprep.subr.mxu0 0.0
        %676 = vmatpush2.msra.mxu0 0.0
        %677 = vmatprep.subr.mxu0 0.0
        %678 = vmatpush2.msra.mxu0 0.0
        %679 = vmatprep.subr.mxu0 0.0
        %680 = vmatpush2.msra.mxu0 0.0
        %681 = vmatprep.subr.mxu0 0.0
        %682 = vmatpush2.msra.mxu0 0.0
        %683 = vmatprep.subr.mxu0 0.0
        %684 = vmatpush2.msra.mxu0 0.0
        %685 = vmatprep.subr.mxu0 0.0
        %686 = vmatpush2.msra.mxu0 0.0
        %687 = vmatprep.subr.mxu0 0.0
        %688 = vmatpush2.msra.mxu0 0.0
        %689 = vmatprep.subr.mxu0 0.0
        %690 = vmatpush2.msra.mxu0 0.0
        %691 = vmatprep.subr.mxu0 0.0
        %692 = vmatpush2.msra.mxu0 0.0
        %693 = vmatprep.subr.mxu0 0.0
        %694 = vmatpush2.msra.mxu0 0.0
        %695 = vmatprep.subr.mxu0 0.0
        %696 = vmatpush2.msra.mxu0 0.0
        %697 = vmatprep.subr.mxu0 0.0
        %698 = vmatpush2.msra.mxu0 0.0
        %699 = vmatprep.subr.mxu0 0.0
        %700 = vmatpush2.msra.mxu0 0.0
        %701 = vmatprep.subr.mxu0 0.0
        %702 = vmatpush2.msra.mxu0 0.0
        %703 = vmatprep.subr.mxu0 0.0
        %704 = vmatpush2.msra.mxu0 0.0
        %705 = vmatprep.mubr.f32.mxu0 0.0
        %v706 = vand.u32 %v320, 4294901760
        %707 = vmatmul.mubr.f32.gmra.mxu0 %v706
        %v708 = vpop.f32.mrf.mxu0
        %v709 = vadd.f32 %v632, %v708
        %v710 = vpop.f32.mrf.mxu0
        %711 = vdwg.mxu0
        %712 = vmatprep.subr.mxu0 0.0
        %713 = vmatpush1.msra.mxu0 0.0
        %714 = vmatprep.subr.mxu0 0.0
        %715 = vmatpush1.msra.mxu0 0.0
        %716 = vmatprep.subr.mxu0 0.0
        %717 = vmatpush1.msra.mxu0 0.0
        %718 = vmatprep.subr.mxu0 0.0
        %719 = vmatpush1.msra.mxu0 0.0
        %720 = vmatprep.subr.mxu0 0.0
        %721 = vmatpush1.msra.mxu0 0.0
        %722 = vmatprep.subr.mxu0 0.0
        %723 = vmatpush1.msra.mxu0 0.0
        %724 = vmatprep.subr.mxu0 0.0
        %725 = vmatpush1.msra.mxu0 0.0
        %726 = vmatprep.subr.mxu0 0.0
        %727 = vmatpush1.msra.mxu0 0.0
        %728 = vmatprep.subr.mxu0 0.0
        %729 = vmatpush1.msra.mxu0 0.0
        %730 = vmatprep.subr.mxu0 0.0
        %731 = vmatpush1.msra.mxu0 0.0
        %732 = vmatprep.subr.mxu0 0.0
        %733 = vmatpush1.msra.mxu0 0.0
        %734 = vmatprep.subr.mxu0 0.0
        %735 = vmatpush1.msra.mxu0 0.0
        %736 = vmatprep.subr.mxu0 0.0
        %737 = vmatpush1.msra.mxu0 0.0
        %738 = vmatprep.subr.mxu0 0.0
        %739 = vmatpush1.msra.mxu0 0.0
        %740 = vmatprep.subr.mxu0 0.0
        %v741 = vand.u32 %v324, 4294901760
        %742 = vmatpush1.msra.mxu0 %v741
        %743 = vmatprep.subr.mxu0 0.0
        %v744 = vand.u32 %v316, 4294901760
        %745 = vmatpush1.msra.mxu0 %v744
        %746 = vmatprep.subr.mxu0 0.0
        %747 = vmatpush2.msra.mxu0 0.0
        %748 = vmatprep.subr.mxu0 0.0
        %749 = vmatpush2.msra.mxu0 0.0
        %750 = vmatprep.subr.mxu0 0.0
        %751 = vmatpush2.msra.mxu0 0.0
        %752 = vmatprep.subr.mxu0 0.0
        %753 = vmatpush2.msra.mxu0 0.0
        %754 = vmatprep.subr.mxu0 0.0
        %755 = vmatpush2.msra.mxu0 0.0
        %756 = vmatprep.subr.mxu0 0.0
        %757 = vmatpush2.msra.mxu0 0.0
        %758 = vmatprep.subr.mxu0 0.0
        %759 = vmatpush2.msra.mxu0 0.0
        %760 = vmatprep.subr.mxu0 0.0
        %761 = vmatpush2.msra.mxu0 0.0
        %762 = vmatprep.subr.mxu0 0.0
        %763 = vmatpush2.msra.mxu0 0.0
        %764 = vmatprep.subr.mxu0 0.0
        %765 = vmatpush2.msra.mxu0 0.0
        %766 = vmatprep.subr.mxu0 0.0
        %767 = vmatpush2.msra.mxu0 0.0
        %768 = vmatprep.subr.mxu0 0.0
        %769 = vmatpush2.msra.mxu0 0.0
        %770 = vmatprep.subr.mxu0 0.0
        %771 = vmatpush2.msra.mxu0 0.0
        %772 = vmatprep.subr.mxu0 0.0
        %773 = vmatpush2.msra.mxu0 0.0
        %774 = vmatprep.subr.mxu0 0.0
        %775 = vmatpush2.msra.mxu0 0.0
        %776 = vmatprep.subr.mxu0 0.0
        %777 = vmatpush2.msra.mxu0 0.0
        %778 = vmatprep.mubr.f32.mxu0 0.0
        %v779 = vand.u32 %v320, 4294901760
        %780 = vmatmul.mubr.f32.gmra.mxu0 %v779
        %v781 = vpop.f32.mrf.mxu0
        %v782 = vadd.f32 %v709, %v781
        %v783 = vpop.f32.mrf.mxu0
        %784 = vdwg.mxu0
        %v785 = vld [vmem:[%s271] sm:$0xff]
        %v786 = vld [vmem:[%s271 + $0x8] sm:$0xff]
        %v787 = vand.u32 %v315, 4294901760
        %788 = vmatprep.subr.mxu0 %v787
        %v789 = vand.u32 %v314, 4294901760
        %790 = vmatpush1.msra.mxu0 %v789
        %v791 = vand.u32 %v313, 4294901760
        %792 = vmatprep.subr.mxu0 %v791
        %v793 = vand.u32 %v312, 4294901760
        %794 = vmatpush1.msra.mxu0 %v793
        %v795 = vand.u32 %v311, 4294901760
        %796 = vmatprep.subr.mxu0 %v795
        %v797 = vand.u32 %v310, 4294901760
        %798 = vmatpush1.msra.mxu0 %v797
        %v799 = vand.u32 %v309, 4294901760
        %800 = vmatprep.subr.mxu0 %v799
        %v801 = vand.u32 %v308, 4294901760
        %802 = vmatpush1.msra.mxu0 %v801
        %v803 = vand.u32 %v307, 4294901760
        %804 = vmatprep.subr.mxu0 %v803
        %v805 = vand.u32 %v306, 4294901760
        %806 = vmatpush1.msra.mxu0 %v805
        %v807 = vand.u32 %v305, 4294901760
        %808 = vmatprep.subr.mxu0 %v807
        %v809 = vand.u32 %v304, 4294901760
        %810 = vmatpush1.msra.mxu0 %v809
        %v811 = vand.u32 %v303, 4294901760
        %812 = vmatprep.subr.mxu0 %v811
        %v813 = vand.u32 %v302, 4294901760
        %814 = vmatpush1.msra.mxu0 %v813
        %v815 = vand.u32 %v301, 4294901760
        %816 = vmatprep.subr.mxu0 %v815
        %v817 = vand.u32 %v300, 4294901760
        %818 = vmatpush1.msra.mxu0 %v817
        %v819 = vand.u32 %v299, 4294901760
        %820 = vmatprep.subr.mxu0 %v819
        %v821 = vand.u32 %v298, 4294901760
        %822 = vmatpush1.msra.mxu0 %v821
        %v823 = vand.u32 %v297, 4294901760
        %824 = vmatprep.subr.mxu0 %v823
        %v825 = vand.u32 %v296, 4294901760
        %826 = vmatpush1.msra.mxu0 %v825
        %v827 = vand.u32 %v295, 4294901760
        %828 = vmatprep.subr.mxu0 %v827
        %v829 = vand.u32 %v294, 4294901760
        %830 = vmatpush1.msra.mxu0 %v829
        %v831 = vand.u32 %v293, 4294901760
        %832 = vmatprep.subr.mxu0 %v831
        %v833 = vand.u32 %v292, 4294901760
        %834 = vmatpush1.msra.mxu0 %v833
        %v835 = vand.u32 %v291, 4294901760
        %836 = vmatprep.subr.mxu0 %v835
        %v837 = vand.u32 %v290, 4294901760
        %838 = vmatpush1.msra.mxu0 %v837
        %v839 = vand.u32 %v289, 4294901760
        %840 = vmatprep.subr.mxu0 %v839
        %v841 = vand.u32 %v288, 4294901760
        %842 = vmatpush1.msra.mxu0 %v841
        %v843 = vand.u32 %v287, 4294901760
        %844 = vmatprep.subr.mxu0 %v843
        %v845 = vand.u32 %v286, 4294901760
        %846 = vmatpush1.msra.mxu0 %v845
        %v847 = vand.u32 %v285, 4294901760
        %848 = vmatprep.subr.mxu0 %v847
        %v849 = vand.u32 %v284, 4294901760
        %850 = vmatpush1.msra.mxu0 %v849
        %851 = vmatprep.subr.mxu0 0.0
        %852 = vmatpush2.msra.mxu0 0.0
        %853 = vmatprep.subr.mxu0 0.0
        %854 = vmatpush2.msra.mxu0 0.0
        %855 = vmatprep.subr.mxu0 0.0
        %856 = vmatpush2.msra.mxu0 0.0
        %857 = vmatprep.subr.mxu0 0.0
        %858 = vmatpush2.msra.mxu0 0.0
        %859 = vmatprep.subr.mxu0 0.0
        %860 = vmatpush2.msra.mxu0 0.0
        %861 = vmatprep.subr.mxu0 0.0
        %862 = vmatpush2.msra.mxu0 0.0
        %863 = vmatprep.subr.mxu0 0.0
        %864 = vmatpush2.msra.mxu0 0.0
        %865 = vmatprep.subr.mxu0 0.0
        %866 = vmatpush2.msra.mxu0 0.0
        %867 = vmatprep.subr.mxu0 0.0
        %868 = vmatpush2.msra.mxu0 0.0
        %869 = vmatprep.subr.mxu0 0.0
        %870 = vmatpush2.msra.mxu0 0.0
        %871 = vmatprep.subr.mxu0 0.0
        %872 = vmatpush2.msra.mxu0 0.0
        %873 = vmatprep.subr.mxu0 0.0
        %874 = vmatpush2.msra.mxu0 0.0
        %875 = vmatprep.subr.mxu0 0.0
        %876 = vmatpush2.msra.mxu0 0.0
        %877 = vmatprep.subr.mxu0 0.0
        %878 = vmatpush2.msra.mxu0 0.0
        %879 = vmatprep.subr.mxu0 0.0
        %880 = vmatpush2.msra.mxu0 0.0
        %881 = vmatprep.subr.mxu0 0.0
        %882 = vmatpush2.msra.mxu0 0.0
        %883 = vmatprep.mubr.f32.mxu0 0.0
        %v884 = vand.u32 %v782, 4294901760
        %v885 = vsub.f32 %v782, %v884
        %v886 = vand.u32 %v885, 4294901760
        %v887 = vsub.f32 %v885, %v886
        %v888 = vand.u32 %v887, 4294901760
        %889 = vmatmul.mubr.f32.gmra.mxu0 %v888
        %v890 = vpop.f32.mrf.mxu0
        %v891 = vadd.f32 %v785, %v890
        %v892 = vpop.f32.mrf.mxu0
        %v893 = vadd.f32 %v786, %v892
        %894 = vdwg.mxu0
        %v895 = vand.u32 %v315, 4294901760
        %v896 = vsub.f32 %v315, %v895
        %v897 = vand.u32 %v896, 4294901760
        %v898 = vsub.f32 %v896, %v897
        %v899 = vand.u32 %v898, 4294901760
        %900 = vmatprep.subr.mxu0 %v899
        %v901 = vand.u32 %v314, 4294901760
        %v902 = vsub.f32 %v314, %v901
        %v903 = vand.u32 %v902, 4294901760
        %v904 = vsub.f32 %v902, %v903
        %v905 = vand.u32 %v904, 4294901760
        %906 = vmatpush1.msra.mxu0 %v905
        %v907 = vand.u32 %v313, 4294901760
        %v908 = vsub.f32 %v313, %v907
        %v909 = vand.u32 %v908, 4294901760
        %v910 = vsub.f32 %v908, %v909
        %v911 = vand.u32 %v910, 4294901760
        %912 = vmatprep.subr.mxu0 %v911
        %v913 = vand.u32 %v312, 4294901760
        %v914 = vsub.f32 %v312, %v913
        %v915 = vand.u32 %v914, 4294901760
        %v916 = vsub.f32 %v914, %v915
        %v917 = vand.u32 %v916, 4294901760
        %918 = vmatpush1.msra.mxu0 %v917
        %v919 = vand.u32 %v311, 4294901760
        %v920 = vsub.f32 %v311, %v919
        %v921 = vand.u32 %v920, 4294901760
        %v922 = vsub.f32 %v920, %v921
        %v923 = vand.u32 %v922, 4294901760
        %924 = vmatprep.subr.mxu0 %v923
        %v925 = vand.u32 %v310, 4294901760
        %v926 = vsub.f32 %v310, %v925
        %v927 = vand.u32 %v926, 4294901760
        %v928 = vsub.f32 %v926, %v927
        %v929 = vand.u32 %v928, 4294901760
        %930 = vmatpush1.msra.mxu0 %v929
        %v931 = vand.u32 %v309, 4294901760
        %v932 = vsub.f32 %v309, %v931
        %v933 = vand.u32 %v932, 4294901760
        %v934 = vsub.f32 %v932, %v933
        %v935 = vand.u32 %v934, 4294901760
        %936 = vmatprep.subr.mxu0 %v935
        %v937 = vand.u32 %v308, 4294901760
        %v938 = vsub.f32 %v308, %v937
        %v939 = vand.u32 %v938, 4294901760
        %v940 = vsub.f32 %v938, %v939
        %v941 = vand.u32 %v940, 4294901760
        %942 = vmatpush1.msra.mxu0 %v941
        %v943 = vand.u32 %v307, 4294901760
        %v944 = vsub.f32 %v307, %v943
        %v945 = vand.u32 %v944, 4294901760
        %v946 = vsub.f32 %v944, %v945
        %v947 = vand.u32 %v946, 4294901760
        %948 = vmatprep.subr.mxu0 %v947
        %v949 = vand.u32 %v306, 4294901760
        %v950 = vsub.f32 %v306, %v949
        %v951 = vand.u32 %v950, 4294901760
        %v952 = vsub.f32 %v950, %v951
        %v953 = vand.u32 %v952, 4294901760
        %954 = vmatpush1.msra.mxu0 %v953
        %v955 = vand.u32 %v305, 4294901760
        %v956 = vsub.f32 %v305, %v955
        %v957 = vand.u32 %v956, 4294901760
        %v958 = vsub.f32 %v956, %v957
        %v959 = vand.u32 %v958, 4294901760
        %960 = vmatprep.subr.mxu0 %v959
        %v961 = vand.u32 %v304, 4294901760
        %v962 = vsub.f32 %v304, %v961
        %v963 = vand.u32 %v962, 4294901760
        %v964 = vsub.f32 %v962, %v963
        %v965 = vand.u32 %v964, 4294901760
        %966 = vmatpush1.msra.mxu0 %v965
        %v967 = vand.u32 %v303, 4294901760
        %v968 = vsub.f32 %v303, %v967
        %v969 = vand.u32 %v968, 4294901760
        %v970 = vsub.f32 %v968, %v969
        %v971 = vand.u32 %v970, 4294901760
        %972 = vmatprep.subr.mxu0 %v971
        %v973 = vand.u32 %v302, 4294901760
        %v974 = vsub.f32 %v302, %v973
        %v975 = vand.u32 %v974, 4294901760
        %v976 = vsub.f32 %v974, %v975
        %v977 = vand.u32 %v976, 4294901760
        %978 = vmatpush1.msra.mxu0 %v977
        %v979 = vand.u32 %v301, 4294901760
        %v980 = vsub.f32 %v301, %v979
        %v981 = vand.u32 %v980, 4294901760
        %v982 = vsub.f32 %v980, %v981
        %v983 = vand.u32 %v982, 4294901760
        %984 = vmatprep.subr.mxu0 %v983
        %v985 = vand.u32 %v300, 4294901760
        %v986 = vsub.f32 %v300, %v985
        %v987 = vand.u32 %v986, 4294901760
        %v988 = vsub.f32 %v986, %v987
        %v989 = vand.u32 %v988, 4294901760
        %990 = vmatpush1.msra.mxu0 %v989
        %v991 = vand.u32 %v299, 4294901760
        %v992 = vsub.f32 %v299, %v991
        %v993 = vand.u32 %v992, 4294901760
        %v994 = vsub.f32 %v992, %v993
        %v995 = vand.u32 %v994, 4294901760
        %996 = vmatprep.subr.mxu0 %v995
        %v997 = vand.u32 %v298, 4294901760
        %v998 = vsub.f32 %v298, %v997
        %v999 = vand.u32 %v998, 4294901760
        %v1000 = vsub.f32 %v998, %v999
        %v1001 = vand.u32 %v1000, 4294901760
        %1002 = vmatpush1.msra.mxu0 %v1001
        %v1003 = vand.u32 %v297, 4294901760
        %v1004 = vsub.f32 %v297, %v1003
        %v1005 = vand.u32 %v1004, 4294901760
        %v1006 = vsub.f32 %v1004, %v1005
        %v1007 = vand.u32 %v1006, 4294901760
        %1008 = vmatprep.subr.mxu0 %v1007
        %v1009 = vand.u32 %v296, 4294901760
        %v1010 = vsub.f32 %v296, %v1009
        %v1011 = vand.u32 %v1010, 4294901760
        %v1012 = vsub.f32 %v1010, %v1011
        %v1013 = vand.u32 %v1012, 4294901760
        %1014 = vmatpush1.msra.mxu0 %v1013
        %v1015 = vand.u32 %v295, 4294901760
        %v1016 = vsub.f32 %v295, %v1015
        %v1017 = vand.u32 %v1016, 4294901760
        %v1018 = vsub.f32 %v1016, %v1017
        %v1019 = vand.u32 %v1018, 4294901760
        %1020 = vmatprep.subr.mxu0 %v1019
        %v1021 = vand.u32 %v294, 4294901760
        %v1022 = vsub.f32 %v294, %v1021
        %v1023 = vand.u32 %v1022, 4294901760
        %v1024 = vsub.f32 %v1022, %v1023
        %v1025 = vand.u32 %v1024, 4294901760
        %1026 = vmatpush1.msra.mxu0 %v1025
        %v1027 = vand.u32 %v293, 4294901760
        %v1028 = vsub.f32 %v293, %v1027
        %v1029 = vand.u32 %v1028, 4294901760
        %v1030 = vsub.f32 %v1028, %v1029
        %v1031 = vand.u32 %v1030, 4294901760
        %1032 = vmatprep.subr.mxu0 %v1031
        %v1033 = vand.u32 %v292, 4294901760
        %v1034 = vsub.f32 %v292, %v1033
        %v1035 = vand.u32 %v1034, 4294901760
        %v1036 = vsub.f32 %v1034, %v1035
        %v1037 = vand.u32 %v1036, 4294901760
        %1038 = vmatpush1.msra.mxu0 %v1037
        %v1039 = vand.u32 %v291, 4294901760
        %v1040 = vsub.f32 %v291, %v1039
        %v1041 = vand.u32 %v1040, 4294901760
        %v1042 = vsub.f32 %v1040, %v1041
        %v1043 = vand.u32 %v1042, 4294901760
        %1044 = vmatprep.subr.mxu0 %v1043
        %v1045 = vand.u32 %v290, 4294901760
        %v1046 = vsub.f32 %v290, %v1045
        %v1047 = vand.u32 %v1046, 4294901760
        %v1048 = vsub.f32 %v1046, %v1047
        %v1049 = vand.u32 %v1048, 4294901760
        %1050 = vmatpush1.msra.mxu0 %v1049
        %v1051 = vand.u32 %v289, 4294901760
        %v1052 = vsub.f32 %v289, %v1051
        %v1053 = vand.u32 %v1052, 4294901760
        %v1054 = vsub.f32 %v1052, %v1053
        %v1055 = vand.u32 %v1054, 4294901760
        %1056 = vmatprep.subr.mxu0 %v1055
        %v1057 = vand.u32 %v288, 4294901760
        %v1058 = vsub.f32 %v288, %v1057
        %v1059 = vand.u32 %v1058, 4294901760
        %v1060 = vsub.f32 %v1058, %v1059
        %v1061 = vand.u32 %v1060, 4294901760
        %1062 = vmatpush1.msra.mxu0 %v1061
        %v1063 = vand.u32 %v287, 4294901760
        %v1064 = vsub.f32 %v287, %v1063
        %v1065 = vand.u32 %v1064, 4294901760
        %v1066 = vsub.f32 %v1064, %v1065
        %v1067 = vand.u32 %v1066, 4294901760
        %1068 = vmatprep.subr.mxu0 %v1067
        %v1069 = vand.u32 %v286, 4294901760
        %v1070 = vsub.f32 %v286, %v1069
        %v1071 = vand.u32 %v1070, 4294901760
        %v1072 = vsub.f32 %v1070, %v1071
        %v1073 = vand.u32 %v1072, 4294901760
        %1074 = vmatpush1.msra.mxu0 %v1073
        %v1075 = vand.u32 %v285, 4294901760
        %v1076 = vsub.f32 %v285, %v1075
        %v1077 = vand.u32 %v1076, 4294901760
        %v1078 = vsub.f32 %v1076, %v1077
        %v1079 = vand.u32 %v1078, 4294901760
        %1080 = vmatprep.subr.mxu0 %v1079
        %v1081 = vand.u32 %v284, 4294901760
        %v1082 = vsub.f32 %v284, %v1081
        %v1083 = vand.u32 %v1082, 4294901760
        %v1084 = vsub.f32 %v1082, %v1083
        %v1085 = vand.u32 %v1084, 4294901760
        %1086 = vmatpush1.msra.mxu0 %v1085
        %1087 = vmatprep.subr.mxu0 0.0
        %1088 = vmatpush2.msra.mxu0 0.0
        %1089 = vmatprep.subr.mxu0 0.0
        %1090 = vmatpush2.msra.mxu0 0.0
        %1091 = vmatprep.subr.mxu0 0.0
        %1092 = vmatpush2.msra.mxu0 0.0
        %1093 = vmatprep.subr.mxu0 0.0
        %1094 = vmatpush2.msra.mxu0 0.0
        %1095 = vmatprep.subr.mxu0 0.0
        %1096 = vmatpush2.msra.mxu0 0.0
        %1097 = vmatprep.subr.mxu0 0.0
        %1098 = vmatpush2.msra.mxu0 0.0
        %1099 = vmatprep.subr.mxu0 0.0
        %1100 = vmatpush2.msra.mxu0 0.0
        %1101 = vmatprep.subr.mxu0 0.0
        %1102 = vmatpush2.msra.mxu0 0.0
        %1103 = vmatprep.subr.mxu0 0.0
        %1104 = vmatpush2.msra.mxu0 0.0
        %1105 = vmatprep.subr.mxu0 0.0
        %1106 = vmatpush2.msra.mxu0 0.0
        %1107 = vmatprep.subr.mxu0 0.0
        %1108 = vmatpush2.msra.mxu0 0.0
        %1109 = vmatprep.subr.mxu0 0.0
        %1110 = vmatpush2.msra.mxu0 0.0
        %1111 = vmatprep.subr.mxu0 0.0
        %1112 = vmatpush2.msra.mxu0 0.0
        %1113 = vmatprep.subr.mxu0 0.0
        %1114 = vmatpush2.msra.mxu0 0.0
        %1115 = vmatprep.subr.mxu0 0.0
        %1116 = vmatpush2.msra.mxu0 0.0
        %1117 = vmatprep.subr.mxu0 0.0
        %1118 = vmatpush2.msra.mxu0 0.0
        %1119 = vmatprep.mubr.f32.mxu0 0.0
        %v1120 = vand.u32 %v782, 4294901760
        %1121 = vmatmul.mubr.f32.gmra.mxu0 %v1120
        %v1122 = vpop.f32.mrf.mxu0
        %v1123 = vadd.f32 %v891, %v1122
        %v1124 = vpop.f32.mrf.mxu0
        %v1125 = vadd.f32 %v893, %v1124
        %1126 = vdwg.mxu0
        %v1127 = vand.u32 %v315, 4294901760
        %v1128 = vsub.f32 %v315, %v1127
        %1129 = vmatprep.subr.mxu0 %v1128
        %v1130 = vand.u32 %v314, 4294901760
        %v1131 = vsub.f32 %v314, %v1130
        %1132 = vmatpush1.msra.mxu0 %v1131
        %v1133 = vand.u32 %v313, 4294901760
        %v1134 = vsub.f32 %v313, %v1133
        %1135 = vmatprep.subr.mxu0 %v1134
        %v1136 = vand.u32 %v312, 4294901760
        %v1137 = vsub.f32 %v312, %v1136
        %1138 = vmatpush1.msra.mxu0 %v1137
        %v1139 = vand.u32 %v311, 4294901760
        %v1140 = vsub.f32 %v311, %v1139
        %1141 = vmatprep.subr.mxu0 %v1140
        %v1142 = vand.u32 %v310, 4294901760
        %v1143 = vsub.f32 %v310, %v1142
        %1144 = vmatpush1.msra.mxu0 %v1143
        %v1145 = vand.u32 %v309, 4294901760
        %v1146 = vsub.f32 %v309, %v1145
        %1147 = vmatprep.subr.mxu0 %v1146
        %v1148 = vand.u32 %v308, 4294901760
        %v1149 = vsub.f32 %v308, %v1148
        %1150 = vmatpush1.msra.mxu0 %v1149
        %v1151 = vand.u32 %v307, 4294901760
        %v1152 = vsub.f32 %v307, %v1151
        %1153 = vmatprep.subr.mxu0 %v1152
        %v1154 = vand.u32 %v306, 4294901760
        %v1155 = vsub.f32 %v306, %v1154
        %1156 = vmatpush1.msra.mxu0 %v1155
        %v1157 = vand.u32 %v305, 4294901760
        %v1158 = vsub.f32 %v305, %v1157
        %1159 = vmatprep.subr.mxu0 %v1158
        %v1160 = vand.u32 %v304, 4294901760
        %v1161 = vsub.f32 %v304, %v1160
        %1162 = vmatpush1.msra.mxu0 %v1161
        %v1163 = vand.u32 %v303, 4294901760
        %v1164 = vsub.f32 %v303, %v1163
        %1165 = vmatprep.subr.mxu0 %v1164
        %v1166 = vand.u32 %v302, 4294901760
        %v1167 = vsub.f32 %v302, %v1166
        %1168 = vmatpush1.msra.mxu0 %v1167
        %v1169 = vand.u32 %v301, 4294901760
        %v1170 = vsub.f32 %v301, %v1169
        %1171 = vmatprep.subr.mxu0 %v1170
        %v1172 = vand.u32 %v300, 4294901760
        %v1173 = vsub.f32 %v300, %v1172
        %1174 = vmatpush1.msra.mxu0 %v1173
        %v1175 = vand.u32 %v299, 4294901760
        %v1176 = vsub.f32 %v299, %v1175
        %1177 = vmatprep.subr.mxu0 %v1176
        %v1178 = vand.u32 %v298, 4294901760
        %v1179 = vsub.f32 %v298, %v1178
        %1180 = vmatpush1.msra.mxu0 %v1179
        %v1181 = vand.u32 %v297, 4294901760
        %v1182 = vsub.f32 %v297, %v1181
        %1183 = vmatprep.subr.mxu0 %v1182
        %v1184 = vand.u32 %v296, 4294901760
        %v1185 = vsub.f32 %v296, %v1184
        %1186 = vmatpush1.msra.mxu0 %v1185
        %v1187 = vand.u32 %v295, 4294901760
        %v1188 = vsub.f32 %v295, %v1187
        %1189 = vmatprep.subr.mxu0 %v1188
        %v1190 = vand.u32 %v294, 4294901760
        %v1191 = vsub.f32 %v294, %v1190
        %1192 = vmatpush1.msra.mxu0 %v1191
        %v1193 = vand.u32 %v293, 4294901760
        %v1194 = vsub.f32 %v293, %v1193
        %1195 = vmatprep.subr.mxu0 %v1194
        %v1196 = vand.u32 %v292, 4294901760
        %v1197 = vsub.f32 %v292, %v1196
        %1198 = vmatpush1.msra.mxu0 %v1197
        %v1199 = vand.u32 %v291, 4294901760
        %v1200 = vsub.f32 %v291, %v1199
        %1201 = vmatprep.subr.mxu0 %v1200
        %v1202 = vand.u32 %v290, 4294901760
        %v1203 = vsub.f32 %v290, %v1202
        %1204 = vmatpush1.msra.mxu0 %v1203
        %v1205 = vand.u32 %v289, 4294901760
        %v1206 = vsub.f32 %v289, %v1205
        %1207 = vmatprep.subr.mxu0 %v1206
        %v1208 = vand.u32 %v288, 4294901760
        %v1209 = vsub.f32 %v288, %v1208
        %1210 = vmatpush1.msra.mxu0 %v1209
        %v1211 = vand.u32 %v287, 4294901760
        %v1212 = vsub.f32 %v287, %v1211
        %1213 = vmatprep.subr.mxu0 %v1212
        %v1214 = vand.u32 %v286, 4294901760
        %v1215 = vsub.f32 %v286, %v1214
        %1216 = vmatpush1.msra.mxu0 %v1215
        %v1217 = vand.u32 %v285, 4294901760
        %v1218 = vsub.f32 %v285, %v1217
        %1219 = vmatprep.subr.mxu0 %v1218
        %v1220 = vand.u32 %v284, 4294901760
        %v1221 = vsub.f32 %v284, %v1220
        %1222 = vmatpush1.msra.mxu0 %v1221
        %1223 = vmatprep.subr.mxu0 0.0
        %1224 = vmatpush2.msra.mxu0 0.0
        %1225 = vmatprep.subr.mxu0 0.0
        %1226 = vmatpush2.msra.mxu0 0.0
        %1227 = vmatprep.subr.mxu0 0.0
        %1228 = vmatpush2.msra.mxu0 0.0
        %1229 = vmatprep.subr.mxu0 0.0
        %1230 = vmatpush2.msra.mxu0 0.0
        %1231 = vmatprep.subr.mxu0 0.0
        %1232 = vmatpush2.msra.mxu0 0.0
        %1233 = vmatprep.subr.mxu0 0.0
        %1234 = vmatpush2.msra.mxu0 0.0
        %1235 = vmatprep.subr.mxu0 0.0
        %1236 = vmatpush2.msra.mxu0 0.0
        %1237 = vmatprep.subr.mxu0 0.0
        %1238 = vmatpush2.msra.mxu0 0.0
        %1239 = vmatprep.subr.mxu0 0.0
        %1240 = vmatpush2.msra.mxu0 0.0
        %1241 = vmatprep.subr.mxu0 0.0
        %1242 = vmatpush2.msra.mxu0 0.0
        %1243 = vmatprep.subr.mxu0 0.0
        %1244 = vmatpush2.msra.mxu0 0.0
        %1245 = vmatprep.subr.mxu0 0.0
        %1246 = vmatpush2.msra.mxu0 0.0
        %1247 = vmatprep.subr.mxu0 0.0
        %1248 = vmatpush2.msra.mxu0 0.0
        %1249 = vmatprep.subr.mxu0 0.0
        %1250 = vmatpush2.msra.mxu0 0.0
        %1251 = vmatprep.subr.mxu0 0.0
        %1252 = vmatpush2.msra.mxu0 0.0
        %1253 = vmatprep.subr.mxu0 0.0
        %1254 = vmatpush2.msra.mxu0 0.0
        %1255 = vmatprep.mubr.f32.mxu0 0.0
        %v1256 = vand.u32 %v782, 4294901760
        %v1257 = vsub.f32 %v782, %v1256
        %1258 = vmatmul.mubr.f32.gmra.mxu0 %v1257
        %v1259 = vpop.f32.mrf.mxu0
        %v1260 = vadd.f32 %v1123, %v1259
        %v1261 = vpop.f32.mrf.mxu0
        %v1262 = vadd.f32 %v1125, %v1261
        %1263 = vdwg.mxu0
        %v1264 = vand.u32 %v315, 4294901760
        %1265 = vmatprep.subr.mxu0 %v1264
        %v1266 = vand.u32 %v314, 4294901760
        %1267 = vmatpush1.msra.mxu0 %v1266
        %v1268 = vand.u32 %v313, 4294901760
        %1269 = vmatprep.subr.mxu0 %v1268
        %v1270 = vand.u32 %v312, 4294901760
        %1271 = vmatpush1.msra.mxu0 %v1270
        %v1272 = vand.u32 %v311, 4294901760
        %1273 = vmatprep.subr.mxu0 %v1272
        %v1274 = vand.u32 %v310, 4294901760
        %1275 = vmatpush1.msra.mxu0 %v1274
        %v1276 = vand.u32 %v309, 4294901760
        %1277 = vmatprep.subr.mxu0 %v1276
        %v1278 = vand.u32 %v308, 4294901760
        %1279 = vmatpush1.msra.mxu0 %v1278
        %v1280 = vand.u32 %v307, 4294901760
        %1281 = vmatprep.subr.mxu0 %v1280
        %v1282 = vand.u32 %v306, 4294901760
        %1283 = vmatpush1.msra.mxu0 %v1282
        %v1284 = vand.u32 %v305, 4294901760
        %1285 = vmatprep.subr.mxu0 %v1284
        %v1286 = vand.u32 %v304, 4294901760
        %1287 = vmatpush1.msra.mxu0 %v1286
        %v1288 = vand.u32 %v303, 4294901760
        %1289 = vmatprep.subr.mxu0 %v1288
        %v1290 = vand.u32 %v302, 4294901760
        %1291 = vmatpush1.msra.mxu0 %v1290
        %v1292 = vand.u32 %v301, 4294901760
        %1293 = vmatprep.subr.mxu0 %v1292
        %v1294 = vand.u32 %v300, 4294901760
        %1295 = vmatpush1.msra.mxu0 %v1294
        %v1296 = vand.u32 %v299, 4294901760
        %1297 = vmatprep.subr.mxu0 %v1296
        %v1298 = vand.u32 %v298, 4294901760
        %1299 = vmatpush1.msra.mxu0 %v1298
        %v1300 = vand.u32 %v297, 4294901760
        %1301 = vmatprep.subr.mxu0 %v1300
        %v1302 = vand.u32 %v296, 4294901760
        %1303 = vmatpush1.msra.mxu0 %v1302
        %v1304 = vand.u32 %v295, 4294901760
        %1305 = vmatprep.subr.mxu0 %v1304
        %v1306 = vand.u32 %v294, 4294901760
        %1307 = vmatpush1.msra.mxu0 %v1306
        %v1308 = vand.u32 %v293, 4294901760
        %1309 = vmatprep.subr.mxu0 %v1308
        %v1310 = vand.u32 %v292, 4294901760
        %1311 = vmatpush1.msra.mxu0 %v1310
        %v1312 = vand.u32 %v291, 4294901760
        %1313 = vmatprep.subr.mxu0 %v1312
        %v1314 = vand.u32 %v290, 4294901760
        %1315 = vmatpush1.msra.mxu0 %v1314
        %v1316 = vand.u32 %v289, 4294901760
        %1317 = vmatprep.subr.mxu0 %v1316
        %v1318 = vand.u32 %v288, 4294901760
        %1319 = vmatpush1.msra.mxu0 %v1318
        %v1320 = vand.u32 %v287, 4294901760
        %1321 = vmatprep.subr.mxu0 %v1320
        %v1322 = vand.u32 %v286, 4294901760
        %1323 = vmatpush1.msra.mxu0 %v1322
        %v1324 = vand.u32 %v285, 4294901760
        %1325 = vmatprep.subr.mxu0 %v1324
        %v1326 = vand.u32 %v284, 4294901760
        %1327 = vmatpush1.msra.mxu0 %v1326
        %1328 = vmatprep.subr.mxu0 0.0
        %1329 = vmatpush2.msra.mxu0 0.0
        %1330 = vmatprep.subr.mxu0 0.0
        %1331 = vmatpush2.msra.mxu0 0.0
        %1332 = vmatprep.subr.mxu0 0.0
        %1333 = vmatpush2.msra.mxu0 0.0
        %1334 = vmatprep.subr.mxu0 0.0
        %1335 = vmatpush2.msra.mxu0 0.0
        %1336 = vmatprep.subr.mxu0 0.0
        %1337 = vmatpush2.msra.mxu0 0.0
        %1338 = vmatprep.subr.mxu0 0.0
        %1339 = vmatpush2.msra.mxu0 0.0
        %1340 = vmatprep.subr.mxu0 0.0
        %1341 = vmatpush2.msra.mxu0 0.0
        %1342 = vmatprep.subr.mxu0 0.0
        %1343 = vmatpush2.msra.mxu0 0.0
        %1344 = vmatprep.subr.mxu0 0.0
        %1345 = vmatpush2.msra.mxu0 0.0
        %1346 = vmatprep.subr.mxu0 0.0
        %1347 = vmatpush2.msra.mxu0 0.0
        %1348 = vmatprep.subr.mxu0 0.0
        %1349 = vmatpush2.msra.mxu0 0.0
        %1350 = vmatprep.subr.mxu0 0.0
        %1351 = vmatpush2.msra.mxu0 0.0
        %1352 = vmatprep.subr.mxu0 0.0
        %1353 = vmatpush2.msra.mxu0 0.0
        %1354 = vmatprep.subr.mxu0 0.0
        %1355 = vmatpush2.msra.mxu0 0.0
        %1356 = vmatprep.subr.mxu0 0.0
        %1357 = vmatpush2.msra.mxu0 0.0
        %1358 = vmatprep.subr.mxu0 0.0
        %1359 = vmatpush2.msra.mxu0 0.0
        %1360 = vmatprep.mubr.f32.mxu0 0.0
        %v1361 = vand.u32 %v782, 4294901760
        %v1362 = vsub.f32 %v782, %v1361
        %v1363 = vand.u32 %v1362, 4294901760
        %1364 = vmatmul.mubr.f32.gmra.mxu0 %v1363
        %v1365 = vpop.f32.mrf.mxu0
        %v1366 = vadd.f32 %v1260, %v1365
        %v1367 = vpop.f32.mrf.mxu0
        %v1368 = vadd.f32 %v1262, %v1367
        %1369 = vdwg.mxu0
        %v1370 = vand.u32 %v315, 4294901760
        %v1371 = vsub.f32 %v315, %v1370
        %v1372 = vand.u32 %v1371, 4294901760
        %1373 = vmatprep.subr.mxu0 %v1372
        %v1374 = vand.u32 %v314, 4294901760
        %v1375 = vsub.f32 %v314, %v1374
        %v1376 = vand.u32 %v1375, 4294901760
        %1377 = vmatpush1.msra.mxu0 %v1376
        %v1378 = vand.u32 %v313, 4294901760
        %v1379 = vsub.f32 %v313, %v1378
        %v1380 = vand.u32 %v1379, 4294901760
        %1381 = vmatprep.subr.mxu0 %v1380
        %v1382 = vand.u32 %v312, 4294901760
        %v1383 = vsub.f32 %v312, %v1382
        %v1384 = vand.u32 %v1383, 4294901760
        %1385 = vmatpush1.msra.mxu0 %v1384
        %v1386 = vand.u32 %v311, 4294901760
        %v1387 = vsub.f32 %v311, %v1386
        %v1388 = vand.u32 %v1387, 4294901760
        %1389 = vmatprep.subr.mxu0 %v1388
        %v1390 = vand.u32 %v310, 4294901760
        %v1391 = vsub.f32 %v310, %v1390
        %v1392 = vand.u32 %v1391, 4294901760
        %1393 = vmatpush1.msra.mxu0 %v1392
        %v1394 = vand.u32 %v309, 4294901760
        %v1395 = vsub.f32 %v309, %v1394
        %v1396 = vand.u32 %v1395, 4294901760
        %1397 = vmatprep.subr.mxu0 %v1396
        %v1398 = vand.u32 %v308, 4294901760
        %v1399 = vsub.f32 %v308, %v1398
        %v1400 = vand.u32 %v1399, 4294901760
        %1401 = vmatpush1.msra.mxu0 %v1400
        %v1402 = vand.u32 %v307, 4294901760
        %v1403 = vsub.f32 %v307, %v1402
        %v1404 = vand.u32 %v1403, 4294901760
        %1405 = vmatprep.subr.mxu0 %v1404
        %v1406 = vand.u32 %v306, 4294901760
        %v1407 = vsub.f32 %v306, %v1406
        %v1408 = vand.u32 %v1407, 4294901760
        %1409 = vmatpush1.msra.mxu0 %v1408
        %v1410 = vand.u32 %v305, 4294901760
        %v1411 = vsub.f32 %v305, %v1410
        %v1412 = vand.u32 %v1411, 4294901760
        %1413 = vmatprep.subr.mxu0 %v1412
        %v1414 = vand.u32 %v304, 4294901760
        %v1415 = vsub.f32 %v304, %v1414
        %v1416 = vand.u32 %v1415, 4294901760
        %1417 = vmatpush1.msra.mxu0 %v1416
        %v1418 = vand.u32 %v303, 4294901760
        %v1419 = vsub.f32 %v303, %v1418
        %v1420 = vand.u32 %v1419, 4294901760
        %1421 = vmatprep.subr.mxu0 %v1420
        %v1422 = vand.u32 %v302, 4294901760
        %v1423 = vsub.f32 %v302, %v1422
        %v1424 = vand.u32 %v1423, 4294901760
        %1425 = vmatpush1.msra.mxu0 %v1424
        %v1426 = vand.u32 %v301, 4294901760
        %v1427 = vsub.f32 %v301, %v1426
        %v1428 = vand.u32 %v1427, 4294901760
        %1429 = vmatprep.subr.mxu0 %v1428
        %v1430 = vand.u32 %v300, 4294901760
        %v1431 = vsub.f32 %v300, %v1430
        %v1432 = vand.u32 %v1431, 4294901760
        %1433 = vmatpush1.msra.mxu0 %v1432
        %v1434 = vand.u32 %v299, 4294901760
        %v1435 = vsub.f32 %v299, %v1434
        %v1436 = vand.u32 %v1435, 4294901760
        %1437 = vmatprep.subr.mxu0 %v1436
        %v1438 = vand.u32 %v298, 4294901760
        %v1439 = vsub.f32 %v298, %v1438
        %v1440 = vand.u32 %v1439, 4294901760
        %1441 = vmatpush1.msra.mxu0 %v1440
        %v1442 = vand.u32 %v297, 4294901760
        %v1443 = vsub.f32 %v297, %v1442
        %v1444 = vand.u32 %v1443, 4294901760
        %1445 = vmatprep.subr.mxu0 %v1444
        %v1446 = vand.u32 %v296, 4294901760
        %v1447 = vsub.f32 %v296, %v1446
        %v1448 = vand.u32 %v1447, 4294901760
        %1449 = vmatpush1.msra.mxu0 %v1448
        %v1450 = vand.u32 %v295, 4294901760
        %v1451 = vsub.f32 %v295, %v1450
        %v1452 = vand.u32 %v1451, 4294901760
        %1453 = vmatprep.subr.mxu0 %v1452
        %v1454 = vand.u32 %v294, 4294901760
        %v1455 = vsub.f32 %v294, %v1454
        %v1456 = vand.u32 %v1455, 4294901760
        %1457 = vmatpush1.msra.mxu0 %v1456
        %v1458 = vand.u32 %v293, 4294901760
        %v1459 = vsub.f32 %v293, %v1458
        %v1460 = vand.u32 %v1459, 4294901760
        %1461 = vmatprep.subr.mxu0 %v1460
        %v1462 = vand.u32 %v292, 4294901760
        %v1463 = vsub.f32 %v292, %v1462
        %v1464 = vand.u32 %v1463, 4294901760
        %1465 = vmatpush1.msra.mxu0 %v1464
        %v1466 = vand.u32 %v291, 4294901760
        %v1467 = vsub.f32 %v291, %v1466
        %v1468 = vand.u32 %v1467, 4294901760
        %1469 = vmatprep.subr.mxu0 %v1468
        %v1470 = vand.u32 %v290, 4294901760
        %v1471 = vsub.f32 %v290, %v1470
        %v1472 = vand.u32 %v1471, 4294901760
        %1473 = vmatpush1.msra.mxu0 %v1472
        %v1474 = vand.u32 %v289, 4294901760
        %v1475 = vsub.f32 %v289, %v1474
        %v1476 = vand.u32 %v1475, 4294901760
        %1477 = vmatprep.subr.mxu0 %v1476
        %v1478 = vand.u32 %v288, 4294901760
        %v1479 = vsub.f32 %v288, %v1478
        %v1480 = vand.u32 %v1479, 4294901760
        %1481 = vmatpush1.msra.mxu0 %v1480
        %v1482 = vand.u32 %v287, 4294901760
        %v1483 = vsub.f32 %v287, %v1482
        %v1484 = vand.u32 %v1483, 4294901760
        %1485 = vmatprep.subr.mxu0 %v1484
        %v1486 = vand.u32 %v286, 4294901760
        %v1487 = vsub.f32 %v286, %v1486
        %v1488 = vand.u32 %v1487, 4294901760
        %1489 = vmatpush1.msra.mxu0 %v1488
        %v1490 = vand.u32 %v285, 4294901760
        %v1491 = vsub.f32 %v285, %v1490
        %v1492 = vand.u32 %v1491, 4294901760
        %1493 = vmatprep.subr.mxu0 %v1492
        %v1494 = vand.u32 %v284, 4294901760
        %v1495 = vsub.f32 %v284, %v1494
        %v1496 = vand.u32 %v1495, 4294901760
        %1497 = vmatpush1.msra.mxu0 %v1496
        %1498 = vmatprep.subr.mxu0 0.0
        %1499 = vmatpush2.msra.mxu0 0.0
        %1500 = vmatprep.subr.mxu0 0.0
        %1501 = vmatpush2.msra.mxu0 0.0
        %1502 = vmatprep.subr.mxu0 0.0
        %1503 = vmatpush2.msra.mxu0 0.0
        %1504 = vmatprep.subr.mxu0 0.0
        %1505 = vmatpush2.msra.mxu0 0.0
        %1506 = vmatprep.subr.mxu0 0.0
        %1507 = vmatpush2.msra.mxu0 0.0
        %1508 = vmatprep.subr.mxu0 0.0
        %1509 = vmatpush2.msra.mxu0 0.0
        %1510 = vmatprep.subr.mxu0 0.0
        %1511 = vmatpush2.msra.mxu0 0.0
        %1512 = vmatprep.subr.mxu0 0.0
        %1513 = vmatpush2.msra.mxu0 0.0
        %1514 = vmatprep.subr.mxu0 0.0
        %1515 = vmatpush2.msra.mxu0 0.0
        %1516 = vmatprep.subr.mxu0 0.0
        %1517 = vmatpush2.msra.mxu0 0.0
        %1518 = vmatprep.subr.mxu0 0.0
        %1519 = vmatpush2.msra.mxu0 0.0
        %1520 = vmatprep.subr.mxu0 0.0
        %1521 = vmatpush2.msra.mxu0 0.0
        %1522 = vmatprep.subr.mxu0 0.0
        %1523 = vmatpush2.msra.mxu0 0.0
        %1524 = vmatprep.subr.mxu0 0.0
        %1525 = vmatpush2.msra.mxu0 0.0
        %1526 = vmatprep.subr.mxu0 0.0
        %1527 = vmatpush2.msra.mxu0 0.0
        %1528 = vmatprep.subr.mxu0 0.0
        %1529 = vmatpush2.msra.mxu0 0.0
        %1530 = vmatprep.mubr.f32.mxu0 0.0
        %v1531 = vand.u32 %v782, 4294901760
        %1532 = vmatmul.mubr.f32.gmra.mxu0 %v1531
        %v1533 = vpop.f32.mrf.mxu0
        %v1534 = vadd.f32 %v1366, %v1533
        %v1535 = vpop.f32.mrf.mxu0
        %v1536 = vadd.f32 %v1368, %v1535
        %1537 = vdwg.mxu0
        %v1538 = vand.u32 %v315, 4294901760
        %1539 = vmatprep.subr.mxu0 %v1538
        %v1540 = vand.u32 %v314, 4294901760
        %1541 = vmatpush1.msra.mxu0 %v1540
        %v1542 = vand.u32 %v313, 4294901760
        %1543 = vmatprep.subr.mxu0 %v1542
        %v1544 = vand.u32 %v312, 4294901760
        %1545 = vmatpush1.msra.mxu0 %v1544
        %v1546 = vand.u32 %v311, 4294901760
        %1547 = vmatprep.subr.mxu0 %v1546
        %v1548 = vand.u32 %v310, 4294901760
        %1549 = vmatpush1.msra.mxu0 %v1548
        %v1550 = vand.u32 %v309, 4294901760
        %1551 = vmatprep.subr.mxu0 %v1550
        %v1552 = vand.u32 %v308, 4294901760
        %1553 = vmatpush1.msra.mxu0 %v1552
        %v1554 = vand.u32 %v307, 4294901760
        %1555 = vmatprep.subr.mxu0 %v1554
        %v1556 = vand.u32 %v306, 4294901760
        %1557 = vmatpush1.msra.mxu0 %v1556
        %v1558 = vand.u32 %v305, 4294901760
        %1559 = vmatprep.subr.mxu0 %v1558
        %v1560 = vand.u32 %v304, 4294901760
        %1561 = vmatpush1.msra.mxu0 %v1560
        %v1562 = vand.u32 %v303, 4294901760
        %1563 = vmatprep.subr.mxu0 %v1562
        %v1564 = vand.u32 %v302, 4294901760
        %1565 = vmatpush1.msra.mxu0 %v1564
        %v1566 = vand.u32 %v301, 4294901760
        %1567 = vmatprep.subr.mxu0 %v1566
        %v1568 = vand.u32 %v300, 4294901760
        %1569 = vmatpush1.msra.mxu0 %v1568
        %v1570 = vand.u32 %v299, 4294901760
        %1571 = vmatprep.subr.mxu0 %v1570
        %v1572 = vand.u32 %v298, 4294901760
        %1573 = vmatpush1.msra.mxu0 %v1572
        %v1574 = vand.u32 %v297, 4294901760
        %1575 = vmatprep.subr.mxu0 %v1574
        %v1576 = vand.u32 %v296, 4294901760
        %1577 = vmatpush1.msra.mxu0 %v1576
        %v1578 = vand.u32 %v295, 4294901760
        %1579 = vmatprep.subr.mxu0 %v1578
        %v1580 = vand.u32 %v294, 4294901760
        %1581 = vmatpush1.msra.mxu0 %v1580
        %v1582 = vand.u32 %v293, 4294901760
        %1583 = vmatprep.subr.mxu0 %v1582
        %v1584 = vand.u32 %v292, 4294901760
        %1585 = vmatpush1.msra.mxu0 %v1584
        %v1586 = vand.u32 %v291, 4294901760
        %1587 = vmatprep.subr.mxu0 %v1586
        %v1588 = vand.u32 %v290, 4294901760
        %1589 = vmatpush1.msra.mxu0 %v1588
        %v1590 = vand.u32 %v289, 4294901760
        %1591 = vmatprep.subr.mxu0 %v1590
        %v1592 = vand.u32 %v288, 4294901760
        %1593 = vmatpush1.msra.mxu0 %v1592
        %v1594 = vand.u32 %v287, 4294901760
        %1595 = vmatprep.subr.mxu0 %v1594
        %v1596 = vand.u32 %v286, 4294901760
        %1597 = vmatpush1.msra.mxu0 %v1596
        %v1598 = vand.u32 %v285, 4294901760
        %1599 = vmatprep.subr.mxu0 %v1598
        %v1600 = vand.u32 %v284, 4294901760
        %1601 = vmatpush1.msra.mxu0 %v1600
        %1602 = vmatprep.subr.mxu0 0.0
        %1603 = vmatpush2.msra.mxu0 0.0
        %1604 = vmatprep.subr.mxu0 0.0
        %1605 = vmatpush2.msra.mxu0 0.0
        %1606 = vmatprep.subr.mxu0 0.0
        %1607 = vmatpush2.msra.mxu0 0.0
        %1608 = vmatprep.subr.mxu0 0.0
        %1609 = vmatpush2.msra.mxu0 0.0
        %1610 = vmatprep.subr.mxu0 0.0
        %1611 = vmatpush2.msra.mxu0 0.0
        %1612 = vmatprep.subr.mxu0 0.0
        %1613 = vmatpush2.msra.mxu0 0.0
        %1614 = vmatprep.subr.mxu0 0.0
        %1615 = vmatpush2.msra.mxu0 0.0
        %1616 = vmatprep.subr.mxu0 0.0
        %1617 = vmatpush2.msra.mxu0 0.0
        %1618 = vmatprep.subr.mxu0 0.0
        %1619 = vmatpush2.msra.mxu0 0.0
        %1620 = vmatprep.subr.mxu0 0.0
        %1621 = vmatpush2.msra.mxu0 0.0
        %1622 = vmatprep.subr.mxu0 0.0
        %1623 = vmatpush2.msra.mxu0 0.0
        %1624 = vmatprep.subr.mxu0 0.0
        %1625 = vmatpush2.msra.mxu0 0.0
        %1626 = vmatprep.subr.mxu0 0.0
        %1627 = vmatpush2.msra.mxu0 0.0
        %1628 = vmatprep.subr.mxu0 0.0
        %1629 = vmatpush2.msra.mxu0 0.0
        %1630 = vmatprep.subr.mxu0 0.0
        %1631 = vmatpush2.msra.mxu0 0.0
        %1632 = vmatprep.subr.mxu0 0.0
        %1633 = vmatpush2.msra.mxu0 0.0
        %1634 = vmatprep.mubr.f32.mxu0 0.0
        %v1635 = vand.u32 %v782, 4294901760
        %1636 = vmatmul.mubr.f32.gmra.mxu0 %v1635
        %v1637 = vpop.f32.mrf.mxu0
        %v1638 = vadd.f32 %v1534, %v1637
        %v1639 = vpop.f32.mrf.mxu0
        %v1640 = vadd.f32 %v1536, %v1639
        %1641 = vdwg.mxu0
        %1642 = vst [vmem:[%s281] sm:$0xff] %v1638
        %1643 = vst [vmem:[%s281 + $0x8] sm:$0xff] %v1640
        %s1644 = smul.u32 2, %s21
        %p1645 = scmp.lt.s32.totalorder %s20, 1
        %s1646 = scalar_select %p1645, %s20, 1
        %p1647 = scmp.lt.s32.totalorder %s1644, 1
        %s1648 = scalar_select %p1647, %s1644, 1
        %s1649 = smul.addr %s1646, 2
        %s1650 = sadd.s32 %s1648, %s1649
        %s1651 = smul.addr %s1650, 8
        %s1652 = scalar_lea.vmem %s4, %s1651
        // Predicated region
        $region41: #{_skip_upsample_impl.1} parent=35 // pred_check
          %p1653 = pneg %p146
        $region42: #{_skip_upsample_impl.1} parent=35 // pred_check_branch
          %1655 = sbr.rel (%p1653) target = $region44
        $region43: #{_skip_upsample_impl.1} parent=35 // pred_region
          %s1656 = smul.u32 2, %s21
        $region44: #{_skip_upsample_impl.1} parent=35 // pred_fallthru
          _
      $region36: #{_skip_upsample_impl.1} parent=5 // pred_fallthru
        _
      %p1657 = scmp.le.s32.totalorder 2, %s11
      // Predicated region
      $region45: #{_skip_upsample_impl.1} parent=5 // pred_check
        %p1658 = pneg %p1657
      $region46: #{_skip_upsample_impl.1} parent=5 // pred_check_branch
        %1660 = sbr.rel (%p1658) target = $region48
      $region47: #{_skip_upsample_impl.1} parent=5 // pred_region
        %s1661 = ssub.s32 %s11, 2
        // Predicated region
        $region49: #{_skip_upsample_impl.1} parent=47 // pred_check
          %p1662 = pneg %p152
        $region50: #{_skip_upsample_impl.1} parent=47 // pred_check_branch
          %1664 = sbr.rel (%p1662) target = $region52
        $region51: #{_skip_upsample_impl.1} parent=47 // pred_region
          %s1665 = smul.u32 2, %s23
          %p1666 = scmp.lt.s32.totalorder %s22, 1
          %s1667 = scalar_select %p1666, %s22, 1
          %p1668 = scmp.lt.s32.totalorder %s1665, 1
          %s1669 = scalar_select %p1668, %s1665, 1
          %s1670 = smul.addr %s1667, 2
          %s1671 = sadd.s32 %s1669, %s1670
          %s1672 = smul.addr %s1671, 8
          %s1673 = scalar_lea.vmem %s4, %s1672
        $region52: #{_skip_upsample_impl.1} parent=47 // pred_fallthru
          _
      $region48: #{_skip_upsample_impl.1} parent=5 // pred_fallthru
        _
    $region6: #{_skip_upsample_impl.1} parent=1 // loop_footer
      %s15 = sadd.s32 1, %s11
    $region7: #{_skip_upsample_impl.1} parent=1 // loop_footer_branch
      %10 = sbr.rel target = $region3
    $region8: #{_skip_upsample_impl.1} parent=1 // loop_exit
      _
    %1674 = vsyncpa [#allocation3], 1
    %s1675 = scalar_lea.sflag [#allocation3], 1
    %1676 = vsyncpa %s1675, 1

</llo_original>
